<compile_context>
chip_gen: v7x
topology: tpu7x:2x2x1
jax: 0.10.0
libtpu: 0.0.40
codegen_flags: <defaults>
</compile_context>

<pallas_src>
import jax
import jax.numpy as jnp
from jax import lax
from jax.experimental import pallas as pl
from jax.experimental.pallas import tpu as pltpu

L_IN = 64          # required so that 64 channels * L/4 == 64*16 for the FC
C1, C2 = 32, 64
L1, L2, L3 = 64, 32, 16
OUT_DIM = 20
OUT_PAD = 128      # FC output padded to a full 128-lane slab
EPS = 1e-5
BLOCK_B = 256      # max batch elements per grid step (v7x-safe, good on v5e/v6e)

PAD_POS = 2                    # zero positions padded on each side of pooled conv1 out
NPADL = L2 + 2 * PAD_POS       # 36 padded pooled positions
HALF1 = NPADL * C1             # 1152 lanes per even/odd half
A1_COLS = 2 * HALF1            # 2304 conv1 matmul output lanes
GROUPS = 8                     # conv2 output-position groups (4 output positions each)
WIN = 8                        # input window positions per group -> K = WIN*C1 = 256
NEG = -1e30                    # "bias" at pad positions: ReLU clamps them to exactly 0


def mapping_kernel(x_ref, a1_ref, b1_ref, a2_ref, b2_ref, wf_ref, bf_ref,
                   out_ref):
    # x_ref : (BB, 64)    bf16  batch on sublanes, sequence on lanes
    # a1_ref: (64, 2304)  bf16  conv1 band matrix, cols = [even-l | odd-l] in a
    #                           36-position zero-padded pooled layout
    # b1_ref: (1, 1152)   f32   folded BN1 bias (NEG at pad positions)
    # a2_ref: (256, 256)  bf16  conv2 banded slab shared by all 8 groups
    # b2_ref: (1, 128)    f32   folded BN2 bias (tiled over 2 pooled positions)
    # wf_ref: (1024, 128) bf16  FC weight, rows = l3*64+c2, cols padded 20->128
    # bf_ref: (1, 128)    f32   FC bias (padded)
    # out_ref:(BB, 128)   f32
    x = x_ref[...]

    # Conv1d(1->32) + folded BN as one MXU matmul over the whole batch tile.
    y1 = jnp.dot(x, a1_ref[...], preferred_element_type=jnp.float32)   # (BB, 2304)
    # MaxPool1d(2) first (even-l half vs odd-l half), then bias + ReLU
    # (valid: bias is channel-only, identical for both halves; ReLU monotone).
    m1 = jnp.maximum(y1[:, :HALF1], y1[:, HALF1:])                     # (BB, 1152)
    p1 = jnp.maximum(m1 + b1_ref[...], 0.0).astype(jnp.bfloat16)
    # Pad positions (first/last 2) are exactly 0: their A1 columns are all-zero
    # and their bias is -1e30, so ReLU clamps to 0 == Conv1d zero padding.

    # Conv1d(32->64) + folded BN, banded: 8 groups x one (BB,256)x(256,256)
    # MXU matmul; each group's input window is a 128-aligned 256-lane slice.
    slab = a2_ref[...]
    b2 = b2_ref[...]
    p2_parts = []
    for g in range(GROUPS):                     # static unroll
        win = p1[:, 128 * g: 128 * g + 256]     # padded positions 4g .. 4g+7
        y2 = jnp.dot(win, slab, preferred_element_type=jnp.float32)    # (BB, 256)
        m2 = jnp.maximum(y2[:, :128], y2[:, 128:])    # MaxPool1d(2) inside group
        p2_parts.append(jnp.maximum(m2 + b2, 0.0).astype(jnp.bfloat16))
    p2 = jnp.concatenate(p2_parts, axis=1)      # (BB, 1024) lanes = (l3, c2)

    # Dropout (eval: identity) + Flatten + Linear(1024 -> 20, padded to 128).
    out = jnp.dot(p2, wf_ref[...], preferred_element_type=jnp.float32)
    out_ref[...] = out + bf_ref[...]


@jax.jit
def mapping_forward(x, packed):
    """x: (B, 64) float32 -> (B, 20) float32 (eval-mode forward)."""
    a1, b1t, a2, b2t, wf, bf = packed
    B, L = x.shape
    assert L == L_IN

    # Batch tile: cap at BLOCK_B, but for moderate B make the parallel grid
    # axis have >= 2 steps so both v7x TensorCores get work.
    half_b = -(-B // 2)
    block_b = min(BLOCK_B, max(16, ((half_b + 15) // 16) * 16))
    n_tiles = -(-B // block_b)
    b_pad = n_tiles * block_b
    xp = jnp.pad(x.astype(jnp.bfloat16), ((0, b_pad - B), (0, 0)))

    flops = 2 * b_pad * (L_IN * A1_COLS + GROUPS * (WIN * C1) * (4 * C2)
                         + (L3 * C2) * OUT_PAD)
    bytes_accessed = (b_pad * L_IN * 2 + b_pad * OUT_PAD * 4
                      + a1.size * 2 + b1t.size * 4 + a2.size * 2
                      + b2t.size * 4 + wf.size * 2 + bf.size * 4)

    out = pl.pallas_call(
        mapping_kernel,
        out_shape=jax.ShapeDtypeStruct((b_pad, OUT_PAD), jnp.float32),
        grid_spec=pltpu.PrefetchScalarGridSpec(
            num_scalar_prefetch=0,
            grid=(n_tiles,),
            in_specs=[
                pl.BlockSpec((block_b, L_IN), lambda i: (i, 0)),      # x tile
                pl.BlockSpec((L1, A1_COLS), lambda i: (0, 0)),        # A1
                pl.BlockSpec((1, HALF1), lambda i: (0, 0)),           # bn1 bias
                pl.BlockSpec((WIN * C1, 4 * C2), lambda i: (0, 0)),   # conv2 slab
                pl.BlockSpec((1, 2 * C2), lambda i: (0, 0)),          # bn2 bias
                pl.BlockSpec((L3 * C2, OUT_PAD), lambda i: (0, 0)),   # fc weight
                pl.BlockSpec((1, OUT_PAD), lambda i: (0, 0)),         # fc bias
            ],
            out_specs=pl.BlockSpec((block_b, OUT_PAD), lambda i: (i, 0)),
        ),
        compiler_params=pltpu.CompilerParams(
            dimension_semantics=("parallel",),
            vmem_limit_bytes=48 * 1024 * 1024,   # < 64 MiB physical on v7x
        ),
        cost_estimate=pl.CostEstimate(flops=flops, transcendentals=0,
                                      bytes_accessed=bytes_accessed),
    )(xp, a1, b1t, a2, b2t, wf, bf)
    return out[:B, :OUT_DIM]


# ----------------------- parameter construction ------------------------------

def init_params(key):
    """Deterministic synthetic parameters matching the nn.Module shapes."""
    ks = jax.random.split(key, 14)
    conv1_w = jax.random.normal(ks[0], (C1, 1, 3), jnp.float32) * 0.3
    conv1_b = 0.1 * jax.random.normal(ks[1], (C1,), jnp.float32)
    gamma1 = 1.0 + 0.1 * jax.random.normal(ks[2], (C1,), jnp.float32)
    beta1 = 0.1 * jax.random.normal(ks[3], (C1,), jnp.float32)
    mean1 = 0.1 * jax.random.normal(ks[4], (C1,), jnp.float32)
    var1 = jax.random.uniform(ks[5], (C1,), jnp.float32, 0.5, 1.5)

    conv2_w = jax.random.normal(ks[6], (C2, C1, 3), jnp.float32) / jnp.sqrt(C1 * 3.0)
    conv2_b = 0.1 * jax.random.normal(ks[7], (C2,), jnp.float32)
    gamma2 = 1.0 + 0.1 * jax.random.normal(ks[8], (C2,), jnp.float32)
    beta2 = 0.1 * jax.random.normal(ks[9], (C2,), jnp.float32)
    mean2 = 0.1 * jax.random.normal(ks[10], (C2,), jnp.float32)
    var2 = jax.random.uniform(ks[11], (C2,), jnp.float32, 0.5, 1.5)

    fc_w = jax.random.normal(ks[12], (OUT_DIM, C2 * L3), jnp.float32) / 32.0
    fc_b = 0.1 * jax.random.normal(ks[13], (OUT_DIM,), jnp.float32)

    return dict(conv1_w=conv1_w, conv1_b=conv1_b, gamma1=gamma1, beta1=beta1,
                mean1=mean1, var1=var1, conv2_w=conv2_w, conv2_b=conv2_b,
                gamma2=gamma2, beta2=beta2, mean2=mean2, var2=var2,
                fc_w=fc_w, fc_b=fc_b)


def _conv_band(w_k_ci_co, length):
    """Band matrix for Conv1d(kernel=3, stride=1, padding=1).

    w_k_ci_co: (3, Cin, Cout).  Returns (length*Cin, length*Cout) with rows
    ordered (l_in, c_in) and columns ordered (l_out, c_out).
    """
    k3, cin, cout = w_k_ci_co.shape
    li = jnp.arange(length)[:, None]          # input position
    lo = jnp.arange(length)[None, :]          # output position
    k = li - lo + 1                           # tap index (padding=1)
    valid = (k >= 0) & (k < k3)
    band = w_k_ci_co[jnp.clip(k, 0, k3 - 1)]              # (L, L, Cin, Cout)
    band = jnp.where(valid[:, :, None, None], band, 0.0)
    band = jnp.transpose(band, (0, 2, 1, 3))              # (l_in, c_in, l_out, c_out)
    return band.reshape(length * cin, length * cout)


def pack_params(p):
    """Fold eval-mode BN into conv weights, build banded/padded kernel operands."""
    s1 = p['gamma1'] / jnp.sqrt(p['var1'] + EPS)
    b1f = (p['conv1_b'] - p['mean1']) * s1 + p['beta1']
    s2 = p['gamma2'] / jnp.sqrt(p['var2'] + EPS)
    b2f = (p['conv2_b'] - p['mean2']) * s2 + p['beta2']

    # conv weights -> (k, cin, cout) with BN scale folded into cout.
    w1 = jnp.transpose(p['conv1_w'] * s1[:, None, None], (2, 1, 0))   # (3, 1, 32)
    w2 = jnp.transpose(p['conv2_w'] * s2[:, None, None], (2, 1, 0))   # (3, 32, 64)

    # --- conv1 band matrix: columns = [even-l | odd-l], each half laid out over
    #     36 zero-padded pooled positions (pad positions have all-zero columns).
    band1 = _conv_band(w1, L1).reshape(L1, L2, 2, C1)                 # (64,32,2,32)
    halves = []
    for par in range(2):                                              # even, odd
        h = jnp.pad(band1[:, :, par, :], ((0, 0), (PAD_POS, PAD_POS), (0, 0)))
        halves.append(h.reshape(L1, HALF1))
    a1 = jnp.concatenate(halves, axis=1)                              # (64, 2304)

    # BN1 bias per (padded position, channel); NEG at pad positions so ReLU
    # forces exact zeros there (emulating Conv1d zero padding for conv2).
    b1_core = jnp.tile(b1f[None, :], (L2, 1))                         # (32, 32)
    b1t = jnp.pad(b1_core, ((PAD_POS, PAD_POS), (0, 0)),
                  constant_values=NEG).reshape(1, HALF1)              # (1, 1152)

    # --- conv2 banded slab, identical for every 4-output-position group.
    #     Rows = (window position w in 0..7, c_in); for group g the window holds
    #     padded pooled positions 4g..4g+7 (real positions 4g-2..4g+5).
    #     Cols = [even outputs l_rel=0,2 | odd outputs l_rel=1,3] x 64 channels.
    l_rel = jnp.array([0, 2, 1, 3])
    tap = jnp.arange(WIN)[:, None] - l_rel[None, :] - 1               # (8, 4)
    valid = (tap >= 0) & (tap < 3)
    slab = w2[jnp.clip(tap, 0, 2)]                                    # (8,4,32,64)
    slab = jnp.where(valid[:, :, None, None], slab, 0.0)
    a2 = jnp.transpose(slab, (0, 2, 1, 3)).reshape(WIN * C1, 4 * C2)  # (256, 256)

    b2t = jnp.tile(b2f, 2).reshape(1, 2 * C2)                         # (1, 128)

    # PyTorch flatten index is c2*16 + l3; the kernel's p2 lanes are l3*64+c2.
    wf = jnp.transpose(p['fc_w'].reshape(OUT_DIM, C2, L3), (2, 1, 0))
    wf = wf.reshape(L3 * C2, OUT_DIM)
    wf = jnp.pad(wf, ((0, 0), (0, OUT_PAD - OUT_DIM)))                # (1024, 128)
    bf = jnp.pad(p['fc_b'], (0, OUT_PAD - OUT_DIM)).reshape(1, OUT_PAD)

    return (a1.astype(jnp.bfloat16), b1t.astype(jnp.float32),
            a2.astype(jnp.bfloat16), b2t.astype(jnp.float32),
            wf.astype(jnp.bfloat16), bf.astype(jnp.float32))


# ----------------------------- reference --------------------------------------

def reference_forward(x, raw):
    """Pure-JAX (XLA) reference of the PyTorch forward, eval mode."""
    B = x.shape[0]
    xx = x[:, None, :]  # NCL
    dn = ('NCH', 'OIH', 'NCH')
    y = lax.conv_general_dilated(xx, raw['conv1_w'], (1,), ((1, 1),),
                                 dimension_numbers=dn)
    y = y + raw['conv1_b'][None, :, None]
    y = ((y - raw['mean1'][None, :, None]) /
         jnp.sqrt(raw['var1'] + EPS)[None, :, None] *
         raw['gamma1'][None, :, None] + raw['beta1'][None, :, None])
    y = jnp.maximum(y, 0.0)
    y = y.reshape(B, C1, L2, 2).max(axis=-1)                     # MaxPool1d(2)

    y = lax.conv_general_dilated(y, raw['conv2_w'], (1,), ((1, 1),),
                                 dimension_numbers=dn)
    y = y + raw['conv2_b'][None, :, None]
    y = ((y - raw['mean2'][None, :, None]) /
         jnp.sqrt(raw['var2'] + EPS)[None, :, None] *
         raw['gamma2'][None, :, None] + raw['beta2'][None, :, None])
    y = jnp.maximum(y, 0.0)
    y = y.reshape(B, C2, L3, 2).max(axis=-1)                     # MaxPool1d(2)

    flat = y.reshape(B, C2 * L3)                                 # torch.flatten(x, 1)
    return flat @ raw['fc_w'].T + raw['fc_b']


if __name__ == "__main__":
    key = jax.random.PRNGKey(0)
    pkey, xkey = jax.random.split(key)
    raw = init_params(pkey)
    packed = pack_params(raw)

    B = 2
    x = jax.random.normal(xkey, (B, L_IN), jnp.float32)

    out = mapping_forward(x, packed)
    out = jax.block_until_ready(out)

    ref = reference_forward(x, raw)
    assert out.shape == (B, OUT_DIM) and out.dtype == jnp.float32
    err = jnp.max(jnp.abs(out - ref))
    if not jnp.allclose(out, ref, atol=2e-2, rtol=2e-2):  # bf16 matmul operands
        raise AssertionError(f"kernel/reference mismatch, max abs diff = {err}")
    print("KERNEL_OK")
</pallas_src>

<mosaic_0001>
module attributes {stable_mosaic.version = 11 : i64} {
  func.func @mapping_kernel(%arg0: i32, %arg1: memref<16x64xbf16, #tpu.memory_space<vmem>>, %arg2: memref<64x2304xbf16, #tpu.memory_space<vmem>>, %arg3: memref<1x1152xf32, #tpu.memory_space<vmem>>, %arg4: memref<256x256xbf16, #tpu.memory_space<vmem>>, %arg5: memref<1x128xf32, #tpu.memory_space<vmem>>, %arg6: memref<1024x128xbf16, #tpu.memory_space<vmem>>, %arg7: memref<1x128xf32, #tpu.memory_space<vmem>>, %arg8: memref<16x128xf32, #tpu.memory_space<vmem>>) attributes {dimension_semantics = [#tpu.dimension_semantics<parallel>], iteration_bounds = array<i64: 1>, scalar_prefetch = 0 : i64, scratch_operands = 0 : i64, tpu.core_type = #tpu.core_type<tc>, window_params = [{transform_indices = @transform_0, window_bounds = array<i64: 16, 64>}, {pipeline_mode = #tpu.pipeline_mode<synchronous>, transform_indices = @transform_1, window_bounds = array<i64: 64, 2304>}, {pipeline_mode = #tpu.pipeline_mode<synchronous>, transform_indices = @transform_2, window_bounds = array<i64: 1, 1152>}, {pipeline_mode = #tpu.pipeline_mode<synchronous>, transform_indices = @transform_3, window_bounds = array<i64: 256, 256>}, {pipeline_mode = #tpu.pipeline_mode<synchronous>, transform_indices = @transform_4, window_bounds = array<i64: 1, 128>}, {pipeline_mode = #tpu.pipeline_mode<synchronous>, transform_indices = @transform_5, window_bounds = array<i64: 1024, 128>}, {pipeline_mode = #tpu.pipeline_mode<synchronous>, transform_indices = @transform_6, window_bounds = array<i64: 1, 128>}, {transform_indices = @transform_7, window_bounds = array<i64: 16, 128>}]} {
    %c0 = arith.constant 0 : index
    %c0_0 = arith.constant 0 : index
    %0 = vector.load %arg1[%c0, %c0_0] : memref<16x64xbf16, #tpu.memory_space<vmem>>, vector<16x64xbf16>
    %c0_1 = arith.constant 0 : index
    %c0_2 = arith.constant 0 : index
    %1 = vector.load %arg2[%c0_1, %c0_2] : memref<64x2304xbf16, #tpu.memory_space<vmem>>, vector<64x2304xbf16>
    %cst = arith.constant dense<0.000000e+00> : vector<16x2304xf32>
    %2 = tpu.matmul %0, %1, %cst {dimension_numbers = #tpu.dot_dimension_numbers<[1], [0], [0], [1], [0, 0, 1, 1], [], []>} : vector<16x64xbf16>, vector<64x2304xbf16>, vector<16x2304xf32> -> vector<16x2304xf32>
    %3 = vector.extract_strided_slice %2 {offsets = [0, 0], sizes = [16, 1152], strides = [1, 1]} : vector<16x2304xf32> to vector<16x1152xf32>
    %4 = vector.extract_strided_slice %2 {offsets = [0, 1152], sizes = [16, 1152], strides = [1, 1]} : vector<16x2304xf32> to vector<16x1152xf32>
    %5 = arith.maximumf %3, %4 : vector<16x1152xf32>
    %c0_3 = arith.constant 0 : index
    %c0_4 = arith.constant 0 : index
    %6 = vector.load %arg3[%c0_3, %c0_4] : memref<1x1152xf32, #tpu.memory_space<vmem>>, vector<1x1152xf32>
    %7 = vector.broadcast %6 : vector<1x1152xf32> to vector<16x1152xf32>
    %8 = arith.addf %5, %7 : vector<16x1152xf32>
    %cst_5 = arith.constant 0.000000e+00 : f32
    %9 = vector.broadcast %cst_5 : f32 to vector<16x1152xf32>
    %10 = arith.maximumf %8, %9 : vector<16x1152xf32>
    %11 = arith.truncf %10 : vector<16x1152xf32> to vector<16x1152xbf16>
    %c0_6 = arith.constant 0 : index
    %c0_7 = arith.constant 0 : index
    %12 = vector.load %arg4[%c0_6, %c0_7] : memref<256x256xbf16, #tpu.memory_space<vmem>>, vector<256x256xbf16>
    %c0_8 = arith.constant 0 : index
    %c0_9 = arith.constant 0 : index
    %13 = vector.load %arg5[%c0_8, %c0_9] : memref<1x128xf32, #tpu.memory_space<vmem>>, vector<1x128xf32>
    %14 = vector.extract_strided_slice %11 {offsets = [0, 0], sizes = [16, 256], strides = [1, 1]} : vector<16x1152xbf16> to vector<16x256xbf16>
    %cst_10 = arith.constant dense<0.000000e+00> : vector<16x256xf32>
    %15 = tpu.matmul %14, %12, %cst_10 {dimension_numbers = #tpu.dot_dimension_numbers<[1], [0], [0], [1], [0, 0, 1, 1], [], []>} : vector<16x256xbf16>, vector<256x256xbf16>, vector<16x256xf32> -> vector<16x256xf32>
    %16 = vector.extract_strided_slice %15 {offsets = [0, 0], sizes = [16, 128], strides = [1, 1]} : vector<16x256xf32> to vector<16x128xf32>
    %17 = vector.extract_strided_slice %15 {offsets = [0, 128], sizes = [16, 128], strides = [1, 1]} : vector<16x256xf32> to vector<16x128xf32>
    %18 = arith.maximumf %16, %17 : vector<16x128xf32>
    %19 = vector.broadcast %13 : vector<1x128xf32> to vector<16x128xf32>
    %20 = arith.addf %18, %19 : vector<16x128xf32>
    %cst_11 = arith.constant 0.000000e+00 : f32
    %21 = vector.broadcast %cst_11 : f32 to vector<16x128xf32>
    %22 = arith.maximumf %20, %21 : vector<16x128xf32>
    %23 = arith.truncf %22 : vector<16x128xf32> to vector<16x128xbf16>
    %24 = vector.extract_strided_slice %11 {offsets = [0, 128], sizes = [16, 256], strides = [1, 1]} : vector<16x1152xbf16> to vector<16x256xbf16>
    %cst_12 = arith.constant dense<0.000000e+00> : vector<16x256xf32>
    %25 = tpu.matmul %24, %12, %cst_12 {dimension_numbers = #tpu.dot_dimension_numbers<[1], [0], [0], [1], [0, 0, 1, 1], [], []>} : vector<16x256xbf16>, vector<256x256xbf16>, vector<16x256xf32> -> vector<16x256xf32>
    %26 = vector.extract_strided_slice %25 {offsets = [0, 0], sizes = [16, 128], strides = [1, 1]} : vector<16x256xf32> to vector<16x128xf32>
    %27 = vector.extract_strided_slice %25 {offsets = [0, 128], sizes = [16, 128], strides = [1, 1]} : vector<16x256xf32> to vector<16x128xf32>
    %28 = arith.maximumf %26, %27 : vector<16x128xf32>
    %29 = vector.broadcast %13 : vector<1x128xf32> to vector<16x128xf32>
    %30 = arith.addf %28, %29 : vector<16x128xf32>
    %cst_13 = arith.constant 0.000000e+00 : f32
    %31 = vector.broadcast %cst_13 : f32 to vector<16x128xf32>
    %32 = arith.maximumf %30, %31 : vector<16x128xf32>
    %33 = arith.truncf %32 : vector<16x128xf32> to vector<16x128xbf16>
    %34 = vector.extract_strided_slice %11 {offsets = [0, 256], sizes = [16, 256], strides = [1, 1]} : vector<16x1152xbf16> to vector<16x256xbf16>
    %cst_14 = arith.constant dense<0.000000e+00> : vector<16x256xf32>
    %35 = tpu.matmul %34, %12, %cst_14 {dimension_numbers = #tpu.dot_dimension_numbers<[1], [0], [0], [1], [0, 0, 1, 1], [], []>} : vector<16x256xbf16>, vector<256x256xbf16>, vector<16x256xf32> -> vector<16x256xf32>
    %36 = vector.extract_strided_slice %35 {offsets = [0, 0], sizes = [16, 128], strides = [1, 1]} : vector<16x256xf32> to vector<16x128xf32>
    %37 = vector.extract_strided_slice %35 {offsets = [0, 128], sizes = [16, 128], strides = [1, 1]} : vector<16x256xf32> to vector<16x128xf32>
    %38 = arith.maximumf %36, %37 : vector<16x128xf32>
    %39 = vector.broadcast %13 : vector<1x128xf32> to vector<16x128xf32>
    %40 = arith.addf %38, %39 : vector<16x128xf32>
    %cst_15 = arith.constant 0.000000e+00 : f32
    %41 = vector.broadcast %cst_15 : f32 to vector<16x128xf32>
    %42 = arith.maximumf %40, %41 : vector<16x128xf32>
    %43 = arith.truncf %42 : vector<16x128xf32> to vector<16x128xbf16>
    %44 = vector.extract_strided_slice %11 {offsets = [0, 384], sizes = [16, 256], strides = [1, 1]} : vector<16x1152xbf16> to vector<16x256xbf16>
    %cst_16 = arith.constant dense<0.000000e+00> : vector<16x256xf32>
    %45 = tpu.matmul %44, %12, %cst_16 {dimension_numbers = #tpu.dot_dimension_numbers<[1], [0], [0], [1], [0, 0, 1, 1], [], []>} : vector<16x256xbf16>, vector<256x256xbf16>, vector<16x256xf32> -> vector<16x256xf32>
    %46 = vector.extract_strided_slice %45 {offsets = [0, 0], sizes = [16, 128], strides = [1, 1]} : vector<16x256xf32> to vector<16x128xf32>
    %47 = vector.extract_strided_slice %45 {offsets = [0, 128], sizes = [16, 128], strides = [1, 1]} : vector<16x256xf32> to vector<16x128xf32>
    %48 = arith.maximumf %46, %47 : vector<16x128xf32>
    %49 = vector.broadcast %13 : vector<1x128xf32> to vector<16x128xf32>
    %50 = arith.addf %48, %49 : vector<16x128xf32>
    %cst_17 = arith.constant 0.000000e+00 : f32
    %51 = vector.broadcast %cst_17 : f32 to vector<16x128xf32>
    %52 = arith.maximumf %50, %51 : vector<16x128xf32>
    %53 = arith.truncf %52 : vector<16x128xf32> to vector<16x128xbf16>
    %54 = vector.extract_strided_slice %11 {offsets = [0, 512], sizes = [16, 256], strides = [1, 1]} : vector<16x1152xbf16> to vector<16x256xbf16>
    %cst_18 = arith.constant dense<0.000000e+00> : vector<16x256xf32>
    %55 = tpu.matmul %54, %12, %cst_18 {dimension_numbers = #tpu.dot_dimension_numbers<[1], [0], [0], [1], [0, 0, 1, 1], [], []>} : vector<16x256xbf16>, vector<256x256xbf16>, vector<16x256xf32> -> vector<16x256xf32>
    %56 = vector.extract_strided_slice %55 {offsets = [0, 0], sizes = [16, 128], strides = [1, 1]} : vector<16x256xf32> to vector<16x128xf32>
    %57 = vector.extract_strided_slice %55 {offsets = [0, 128], sizes = [16, 128], strides = [1, 1]} : vector<16x256xf32> to vector<16x128xf32>
    %58 = arith.maximumf %56, %57 : vector<16x128xf32>
    %59 = vector.broadcast %13 : vector<1x128xf32> to vector<16x128xf32>
    %60 = arith.addf %58, %59 : vector<16x128xf32>
    %cst_19 = arith.constant 0.000000e+00 : f32
    %61 = vector.broadcast %cst_19 : f32 to vector<16x128xf32>
    %62 = arith.maximumf %60, %61 : vector<16x128xf32>
    %63 = arith.truncf %62 : vector<16x128xf32> to vector<16x128xbf16>
    %64 = vector.extract_strided_slice %11 {offsets = [0, 640], sizes = [16, 256], strides = [1, 1]} : vector<16x1152xbf16> to vector<16x256xbf16>
    %cst_20 = arith.constant dense<0.000000e+00> : vector<16x256xf32>
    %65 = tpu.matmul %64, %12, %cst_20 {dimension_numbers = #tpu.dot_dimension_numbers<[1], [0], [0], [1], [0, 0, 1, 1], [], []>} : vector<16x256xbf16>, vector<256x256xbf16>, vector<16x256xf32> -> vector<16x256xf32>
    %66 = vector.extract_strided_slice %65 {offsets = [0, 0], sizes = [16, 128], strides = [1, 1]} : vector<16x256xf32> to vector<16x128xf32>
    %67 = vector.extract_strided_slice %65 {offsets = [0, 128], sizes = [16, 128], strides = [1, 1]} : vector<16x256xf32> to vector<16x128xf32>
    %68 = arith.maximumf %66, %67 : vector<16x128xf32>
    %69 = vector.broadcast %13 : vector<1x128xf32> to vector<16x128xf32>
    %70 = arith.addf %68, %69 : vector<16x128xf32>
    %cst_21 = arith.constant 0.000000e+00 : f32
    %71 = vector.broadcast %cst_21 : f32 to vector<16x128xf32>
    %72 = arith.maximumf %70, %71 : vector<16x128xf32>
    %73 = arith.truncf %72 : vector<16x128xf32> to vector<16x128xbf16>
    %74 = vector.extract_strided_slice %11 {offsets = [0, 768], sizes = [16, 256], strides = [1, 1]} : vector<16x1152xbf16> to vector<16x256xbf16>
    %cst_22 = arith.constant dense<0.000000e+00> : vector<16x256xf32>
    %75 = tpu.matmul %74, %12, %cst_22 {dimension_numbers = #tpu.dot_dimension_numbers<[1], [0], [0], [1], [0, 0, 1, 1], [], []>} : vector<16x256xbf16>, vector<256x256xbf16>, vector<16x256xf32> -> vector<16x256xf32>
    %76 = vector.extract_strided_slice %75 {offsets = [0, 0], sizes = [16, 128], strides = [1, 1]} : vector<16x256xf32> to vector<16x128xf32>
    %77 = vector.extract_strided_slice %75 {offsets = [0, 128], sizes = [16, 128], strides = [1, 1]} : vector<16x256xf32> to vector<16x128xf32>
    %78 = arith.maximumf %76, %77 : vector<16x128xf32>
    %79 = vector.broadcast %13 : vector<1x128xf32> to vector<16x128xf32>
    %80 = arith.addf %78, %79 : vector<16x128xf32>
    %cst_23 = arith.constant 0.000000e+00 : f32
    %81 = vector.broadcast %cst_23 : f32 to vector<16x128xf32>
    %82 = arith.maximumf %80, %81 : vector<16x128xf32>
    %83 = arith.truncf %82 : vector<16x128xf32> to vector<16x128xbf16>
    %84 = vector.extract_strided_slice %11 {offsets = [0, 896], sizes = [16, 256], strides = [1, 1]} : vector<16x1152xbf16> to vector<16x256xbf16>
    %cst_24 = arith.constant dense<0.000000e+00> : vector<16x256xf32>
    %85 = tpu.matmul %84, %12, %cst_24 {dimension_numbers = #tpu.dot_dimension_numbers<[1], [0], [0], [1], [0, 0, 1, 1], [], []>} : vector<16x256xbf16>, vector<256x256xbf16>, vector<16x256xf32> -> vector<16x256xf32>
    %86 = vector.extract_strided_slice %85 {offsets = [0, 0], sizes = [16, 128], strides = [1, 1]} : vector<16x256xf32> to vector<16x128xf32>
    %87 = vector.extract_strided_slice %85 {offsets = [0, 128], sizes = [16, 128], strides = [1, 1]} : vector<16x256xf32> to vector<16x128xf32>
    %88 = arith.maximumf %86, %87 : vector<16x128xf32>
    %89 = vector.broadcast %13 : vector<1x128xf32> to vector<16x128xf32>
    %90 = arith.addf %88, %89 : vector<16x128xf32>
    %cst_25 = arith.constant 0.000000e+00 : f32
    %91 = vector.broadcast %cst_25 : f32 to vector<16x128xf32>
    %92 = arith.maximumf %90, %91 : vector<16x128xf32>
    %93 = arith.truncf %92 : vector<16x128xf32> to vector<16x128xbf16>
    %94 = tpu.concatenate %23, %33, %43, %53, %63, %73, %83, %93 in 1 : vector<16x128xbf16>, vector<16x128xbf16>, vector<16x128xbf16>, vector<16x128xbf16>, vector<16x128xbf16>, vector<16x128xbf16>, vector<16x128xbf16>, vector<16x128xbf16> -> vector<16x1024xbf16>
    %c0_26 = arith.constant 0 : index
    %c0_27 = arith.constant 0 : index
    %95 = vector.load %arg6[%c0_26, %c0_27] : memref<1024x128xbf16, #tpu.memory_space<vmem>>, vector<1024x128xbf16>
    %cst_28 = arith.constant dense<0.000000e+00> : vector<16x128xf32>
    %96 = tpu.matmul %94, %95, %cst_28 {dimension_numbers = #tpu.dot_dimension_numbers<[1], [0], [0], [1], [0, 0, 1, 1], [], []>} : vector<16x1024xbf16>, vector<1024x128xbf16>, vector<16x128xf32> -> vector<16x128xf32>
    %c0_29 = arith.constant 0 : index
    %c0_30 = arith.constant 0 : index
    %97 = vector.load %arg7[%c0_29, %c0_30] : memref<1x128xf32, #tpu.memory_space<vmem>>, vector<1x128xf32>
    %98 = vector.broadcast %97 : vector<1x128xf32> to vector<16x128xf32>
    %99 = arith.addf %96, %98 : vector<16x128xf32>
    %c0_31 = arith.constant 0 : index
    %c0_32 = arith.constant 0 : index
    %100 = vector.load %arg8[%c0_31, %c0_32] : memref<16x128xf32, #tpu.memory_space<vmem>>, vector<16x128xf32>
    tpu.vector_store %arg8[%c0_31, %c0_32], %99 {strides = array<i32>} : memref<16x128xf32, #tpu.memory_space<vmem>>, vector<16x128xf32>,
    return
  }
  func.func @transform_0(%arg0: i32) -> (i32, i32) {
    %c0_i32 = arith.constant 0 : i32
    %c0_i32_0 = arith.constant 0 : i32
    return %arg0, %c0_i32 : i32, i32
  }
  func.func @transform_1(%arg0: i32) -> (i32, i32) {
    %c0_i32 = arith.constant 0 : i32
    %c0_i32_0 = arith.constant 0 : i32
    %c0_i32_1 = arith.constant 0 : i32
    return %c0_i32, %c0_i32_0 : i32, i32
  }
  func.func @transform_2(%arg0: i32) -> (i32, i32) {
    %c0_i32 = arith.constant 0 : i32
    %c0_i32_0 = arith.constant 0 : i32
    %c0_i32_1 = arith.constant 0 : i32
    return %c0_i32, %c0_i32_0 : i32, i32
  }
  func.func @transform_3(%arg0: i32) -> (i32, i32) {
    %c0_i32 = arith.constant 0 : i32
    %c0_i32_0 = arith.constant 0 : i32
    %c0_i32_1 = arith.constant 0 : i32
    return %c0_i32, %c0_i32_0 : i32, i32
  }
  func.func @transform_4(%arg0: i32) -> (i32, i32) {
    %c0_i32 = arith.constant 0 : i32
    %c0_i32_0 = arith.constant 0 : i32
    %c0_i32_1 = arith.constant 0 : i32
    return %c0_i32, %c0_i32_0 : i32, i32
  }
  func.func @transform_5(%arg0: i32) -> (i32, i32) {
    %c0_i32 = arith.constant 0 : i32
    %c0_i32_0 = arith.constant 0 : i32
    %c0_i32_1 = arith.constant 0 : i32
    return %c0_i32, %c0_i32_0 : i32, i32
  }
  func.func @transform_6(%arg0: i32) -> (i32, i32) {
    %c0_i32 = arith.constant 0 : i32
    %c0_i32_0 = arith.constant 0 : i32
    %c0_i32_1 = arith.constant 0 : i32
    return %c0_i32, %c0_i32_0 : i32, i32
  }
  func.func @transform_7(%arg0: i32) -> (i32, i32) {
    %c0_i32 = arith.constant 0 : i32
    %c0_i32_0 = arith.constant 0 : i32
    return %arg0, %c0_i32 : i32, i32
  }
}

</mosaic_0001>

<llo_original>
// kernel: mapping_forward.1
$region0: #{mapping_forward.1}
  #allocation0 [shape = 'u32[]', space=smem, size = 0x4, offset = 0x4, fixed_abs, tag = 'smem constant byte address 0x4 - core index']
  #allocation1 [shape = 'u32[144,128]{1,0:T(1,128)}', space=vmem, size = 0x12000, scoped, tag = 'internal scratch']
  %s0 = inlined_call_operand.vmem [shape: bf16[16,64], index: 0, kind: input, shape index: {}]
  %s1 = inlined_call_operand.hbm [shape: bf16[64,2304], index: 1, kind: input, shape index: {}]
  %s2 = inlined_call_operand.vmem [shape: f32[1,1152], index: 2, kind: input, shape index: {}]
  %s3 = inlined_call_operand.hbm [shape: bf16[256,256], index: 3, kind: input, shape index: {}]
  %s4 = inlined_call_operand.vmem [shape: f32[1,128], index: 4, kind: input, shape index: {}]
  %s5 = inlined_call_operand.hbm [shape: bf16[1024,128], index: 5, kind: input, shape index: {}]
  %s6 = inlined_call_operand.vmem [shape: f32[1,128], index: 6, kind: input, shape index: {}]
  %s7 = inlined_call_operand.vmem [shape: f32[16,128], index: 7, kind: output, shape index: {}]
  %s8 = sld [smem:[#allocation0]]
  $region50: #{mapping_forward.1} parent=0
    _
  %s10 = ssub.s32 1, %s8
  %s11 = scalar_select 0, %s10, %s8
  $region1: #{mapping_forward.1} parent=0
    #allocation2 [shape = 'u8[294912]{0}', space=vmem, size = 0x48000, scoped, tag = 'input window, operand 1, single buffered']
    #allocation3 [shape = 's32[1]{0}', space=sflag, size = 0x4, scoped, tag = 'scoped memory for mapping_forward.1']
    #allocation4 [shape = 'u8[131072]{0}', space=vmem, size = 0x20000, scoped, tag = 'input window, operand 3, single buffered']
    #allocation5 [shape = 's32[1]{0}', space=sflag, size = 0x4, scoped, tag = 'scoped memory for mapping_forward.1']
    #allocation6 [shape = 'u8[262144]{0}', space=vmem, size = 0x40000, scoped, tag = 'input window, operand 5, single buffered']
    %12 = vsyncpa [#allocation3], 0
    %13 = vsyncpa [#allocation5], 0
    // Predicated region
    $region2: #{mapping_forward.1} parent=1 // pred_check
      _
    $region3: #{mapping_forward.1} parent=1 // pred_check_branch
      %15 = sbr.rel (0) target = $region5
    $region4: #{mapping_forward.1} parent=1 // pred_region
      _
    $region5: #{mapping_forward.1} parent=1 // pred_fallthru
      _
    // Predicated region
    $region6: #{mapping_forward.1} parent=1 // pred_check
      _
    $region7: #{mapping_forward.1} parent=1 // pred_check_branch
      %17 = sbr.rel (0) target = $region9
    $region8: #{mapping_forward.1} parent=1 // pred_region
      %s19 = ssub.s32 9216, 9216
      %20 = vsyncadd [#allocation3], %s19
      %s21 = sshll.u32 [#allocation2], 4
      %s22 = int_to_ptr.vmem [resolvable:$true] %s21
      %27 = dma.hbm_to_vmem [thread:$0]  %s1, 9216, %s22, [#allocation3], 1152, 1152, 72
    $region9: #{mapping_forward.1} parent=1 // pred_fallthru
      _
    // Predicated region
    $region10: #{mapping_forward.1} parent=1 // pred_check
      _
    $region11: #{mapping_forward.1} parent=1 // pred_check_branch
      %29 = sbr.rel (0) target = $region13
    $region12: #{mapping_forward.1} parent=1 // pred_region
      _
    $region13: #{mapping_forward.1} parent=1 // pred_fallthru
      _
    // Predicated region
    $region14: #{mapping_forward.1} parent=1 // pred_check
      _
    $region15: #{mapping_forward.1} parent=1 // pred_check_branch
      %31 = sbr.rel (0) target = $region17
    $region16: #{mapping_forward.1} parent=1 // pred_region
      %s33 = ssub.s32 4096, 4096
      %34 = vsyncadd [#allocation5], %s33
      %s35 = sshll.u32 [#allocation4], 4
      %s36 = int_to_ptr.vmem [resolvable:$true] %s35
      %41 = dma.hbm_to_vmem [thread:$0]  %s3, 4096, %s36, [#allocation5], 128, 128, 8
    $region17: #{mapping_forward.1} parent=1 // pred_fallthru
      _
    // Predicated region
    $region18: #{mapping_forward.1} parent=1 // pred_check
      _
    $region19: #{mapping_forward.1} parent=1 // pred_check_branch
      %43 = sbr.rel (0) target = $region21
    $region20: #{mapping_forward.1} parent=1 // pred_region
      _
    $region21: #{mapping_forward.1} parent=1 // pred_fallthru
      _
    // Predicated region
    $region22: #{mapping_forward.1} parent=1 // pred_check
      _
    $region23: #{mapping_forward.1} parent=1 // pred_check_branch
      %45 = sbr.rel (0) target = $region25
    $region24: #{mapping_forward.1} parent=1 // pred_region
      %s47 = ssub.s32 8192, 8192
      %48 = vsyncadd [#allocation5], %s47
      %s49 = sshll.u32 [#allocation6], 4
      %s50 = int_to_ptr.vmem [resolvable:$true] %s49
      %55 = dma.hbm_to_vmem [thread:$0]  %s5, 8192, %s50, [#allocation5], 64, 64, 4
    $region25: #{mapping_forward.1} parent=1 // pred_fallthru
      _
    // Predicated region
    $region26: #{mapping_forward.1} parent=1 // pred_check
      _
    $region27: #{mapping_forward.1} parent=1 // pred_check_branch
      %57 = sbr.rel (0) target = $region29
    $region28: #{mapping_forward.1} parent=1 // pred_region
      _
    $region29: #{mapping_forward.1} parent=1 // pred_fallthru
      _
    // Predicated region
    $region30: #{mapping_forward.1} parent=1 // pred_check
      _
    $region31: #{mapping_forward.1} parent=1 // pred_check_branch
      %59 = sbr.rel (0) target = $region33
    $region32: #{mapping_forward.1} parent=1 // pred_region
      %60 = dma.done [#allocation3], 9216
    $region33: #{mapping_forward.1} parent=1 // pred_fallthru
      _
    // Predicated region
    $region34: #{mapping_forward.1} parent=1 // pred_check
      _
    $region35: #{mapping_forward.1} parent=1 // pred_check_branch
      %62 = sbr.rel (0) target = $region37
    $region36: #{mapping_forward.1} parent=1 // pred_region
      %63 = dma.done [#allocation5], 4096
    $region37: #{mapping_forward.1} parent=1 // pred_fallthru
      _
    // Predicated region
    $region38: #{mapping_forward.1} parent=1 // pred_check
      _
    $region39: #{mapping_forward.1} parent=1 // pred_check_branch
      %65 = sbr.rel (0) target = $region41
    $region40: #{mapping_forward.1} parent=1 // pred_region
      %66 = dma.done [#allocation5], 8192
    $region41: #{mapping_forward.1} parent=1 // pred_fallthru
      _
    %v68 = vld [vmem:[%s0] sm:$0xf]
    %v69 = vld [vmem:[%s0 + $0x4] sm:$0xf]
    %v70 = vld [vmem:[#allocation2] sm:$0xff]
    %v71 = vld [vmem:[#allocation2 + $0x8] sm:$0xff]
    %v72 = vld [vmem:[#allocation2 + $0x10] sm:$0xff]
    %v73 = vld [vmem:[#allocation2 + $0x18] sm:$0xff]
    %v74 = vld [vmem:[#allocation2 + $0x20] sm:$0xff]
    %v75 = vld [vmem:[#allocation2 + $0x28] sm:$0xff]
    %v76 = vld [vmem:[#allocation2 + $0x30] sm:$0xff]
    %v77 = vld [vmem:[#allocation2 + $0x38] sm:$0xff]
    %v78 = vld [vmem:[#allocation2 + $0x40] sm:$0xff]
    %v79 = vld [vmem:[#allocation2 + $0x48] sm:$0xff]
    %v80 = vld [vmem:[#allocation2 + $0x50] sm:$0xff]
    %v81 = vld [vmem:[#allocation2 + $0x58] sm:$0xff]
    %v82 = vld [vmem:[#allocation2 + $0x60] sm:$0xff]
    %v83 = vld [vmem:[#allocation2 + $0x68] sm:$0xff]
    %v84 = vld [vmem:[#allocation2 + $0x70] sm:$0xff]
    %v85 = vld [vmem:[#allocation2 + $0x78] sm:$0xff]
    %v86 = vld [vmem:[#allocation2 + $0x80] sm:$0xff]
    %v87 = vld [vmem:[#allocation2 + $0x88] sm:$0xff]
    %v88 = vld [vmem:[#allocation2 + $0x90] sm:$0xff]
    %v89 = vld [vmem:[#allocation2 + $0x98] sm:$0xff]
    %v90 = vld [vmem:[#allocation2 + $0xa0] sm:$0xff]
    %v91 = vld [vmem:[#allocation2 + $0xa8] sm:$0xff]
    %v92 = vld [vmem:[#allocation2 + $0xb0] sm:$0xff]
    %v93 = vld [vmem:[#allocation2 + $0xb8] sm:$0xff]
    %v94 = vld [vmem:[#allocation2 + $0xc0] sm:$0xff]
    %v95 = vld [vmem:[#allocation2 + $0xc8] sm:$0xff]
    %v96 = vld [vmem:[#allocation2 + $0xd0] sm:$0xff]
    %v97 = vld [vmem:[#allocation2 + $0xd8] sm:$0xff]
    %v98 = vld [vmem:[#allocation2 + $0xe0] sm:$0xff]
    %v99 = vld [vmem:[#allocation2 + $0xe8] sm:$0xff]
    %v100 = vld [vmem:[#allocation2 + $0xf0] sm:$0xff]
    %v101 = vld [vmem:[#allocation2 + $0xf8] sm:$0xff]
    %v102 = vld [vmem:[#allocation2 + $0x100] sm:$0xff]
    %v103 = vld [vmem:[#allocation2 + $0x108] sm:$0xff]
    %v104 = vld [vmem:[#allocation2 + $0x110] sm:$0xff]
    %v105 = vld [vmem:[#allocation2 + $0x118] sm:$0xff]
    %v106 = vld [vmem:[#allocation2 + $0x120] sm:$0xff]
    %v107 = vld [vmem:[#allocation2 + $0x128] sm:$0xff]
    %v108 = vld [vmem:[#allocation2 + $0x130] sm:$0xff]
    %v109 = vld [vmem:[#allocation2 + $0x138] sm:$0xff]
    %v110 = vld [vmem:[#allocation2 + $0x140] sm:$0xff]
    %v111 = vld [vmem:[#allocation2 + $0x148] sm:$0xff]
    %v112 = vld [vmem:[#allocation2 + $0x150] sm:$0xff]
    %v113 = vld [vmem:[#allocation2 + $0x158] sm:$0xff]
    %v114 = vld [vmem:[#allocation2 + $0x160] sm:$0xff]
    %v115 = vld [vmem:[#allocation2 + $0x168] sm:$0xff]
    %v116 = vld [vmem:[#allocation2 + $0x170] sm:$0xff]
    %v117 = vld [vmem:[#allocation2 + $0x178] sm:$0xff]
    %v118 = vld [vmem:[#allocation2 + $0x180] sm:$0xff]
    %v119 = vld [vmem:[#allocation2 + $0x188] sm:$0xff]
    %v120 = vld [vmem:[#allocation2 + $0x190] sm:$0xff]
    %v121 = vld [vmem:[#allocation2 + $0x198] sm:$0xff]
    %v122 = vld [vmem:[#allocation2 + $0x1a0] sm:$0xff]
    %v123 = vld [vmem:[#allocation2 + $0x1a8] sm:$0xff]
    %v124 = vld [vmem:[#allocation2 + $0x1b0] sm:$0xff]
    %v125 = vld [vmem:[#allocation2 + $0x1b8] sm:$0xff]
    %v126 = vld [vmem:[#allocation2 + $0x1c0] sm:$0xff]
    %v127 = vld [vmem:[#allocation2 + $0x1c8] sm:$0xff]
    %v128 = vld [vmem:[#allocation2 + $0x1d0] sm:$0xff]
    %v129 = vld [vmem:[#allocation2 + $0x1d8] sm:$0xff]
    %v130 = vld [vmem:[#allocation2 + $0x1e0] sm:$0xff]
    %v131 = vld [vmem:[#allocation2 + $0x1e8] sm:$0xff]
    %v132 = vld [vmem:[#allocation2 + $0x1f0] sm:$0xff]
    %v133 = vld [vmem:[#allocation2 + $0x1f8] sm:$0xff]
    %v134 = vld [vmem:[#allocation2 + $0x200] sm:$0xff]
    %v135 = vld [vmem:[#allocation2 + $0x208] sm:$0xff]
    %v136 = vld [vmem:[#allocation2 + $0x210] sm:$0xff]
    %v137 = vld [vmem:[#allocation2 + $0x218] sm:$0xff]
    %v138 = vld [vmem:[#allocation2 + $0x220] sm:$0xff]
    %v139 = vld [vmem:[#allocation2 + $0x228] sm:$0xff]
    %v140 = vld [vmem:[#allocation2 + $0x230] sm:$0xff]
    %v141 = vld [vmem:[#allocation2 + $0x238] sm:$0xff]
    %v144 = vunpack.c.l.b16 %v68
    %v145 = vunpack.c.l.b16 %v69
    %v146 = vpack.c.b16 %v145, %v144
    %v219 = vunpack.c.l.b16 %v70
    %v220 = vunpack.c.h.b16 %v70
    %v221 = vunpack.c.l.b16 %v71
    %v222 = vunpack.c.h.b16 %v71
    %v223 = vunpack.c.l.b16 %v72
    %v224 = vunpack.c.h.b16 %v72
    %v225 = vunpack.c.l.b16 %v73
    %v226 = vunpack.c.h.b16 %v73
    %v227 = vunpack.c.l.b16 %v74
    %v228 = vunpack.c.h.b16 %v74
    %v229 = vunpack.c.l.b16 %v75
    %v230 = vunpack.c.h.b16 %v75
    %v231 = vunpack.c.l.b16 %v76
    %v232 = vunpack.c.h.b16 %v76
    %v233 = vunpack.c.l.b16 %v77
    %v234 = vunpack.c.h.b16 %v77
    %v235 = vunpack.c.l.b16 %v78
    %v236 = vunpack.c.h.b16 %v78
    %v237 = vunpack.c.l.b16 %v79
    %v238 = vunpack.c.h.b16 %v79
    %v239 = vunpack.c.l.b16 %v80
    %v240 = vunpack.c.h.b16 %v80
    %v241 = vunpack.c.l.b16 %v81
    %v242 = vunpack.c.h.b16 %v81
    %v243 = vunpack.c.l.b16 %v82
    %v244 = vunpack.c.h.b16 %v82
    %v245 = vunpack.c.l.b16 %v83
    %v246 = vunpack.c.h.b16 %v83
    %v247 = vunpack.c.l.b16 %v84
    %v248 = vunpack.c.h.b16 %v84
    %v249 = vunpack.c.l.b16 %v85
    %v250 = vunpack.c.h.b16 %v85
    %v251 = vunpack.c.l.b16 %v86
    %v252 = vunpack.c.h.b16 %v86
    %v253 = vunpack.c.l.b16 %v87
    %v254 = vunpack.c.h.b16 %v87
    %v255 = vunpack.c.l.b16 %v88
    %v256 = vunpack.c.h.b16 %v88
    %v257 = vunpack.c.l.b16 %v89
    %v258 = vunpack.c.h.b16 %v89
    %v259 = vunpack.c.l.b16 %v90
    %v260 = vunpack.c.h.b16 %v90
    %v261 = vunpack.c.l.b16 %v91
    %v262 = vunpack.c.h.b16 %v91
    %v263 = vunpack.c.l.b16 %v92
    %v264 = vunpack.c.h.b16 %v92
    %v265 = vunpack.c.l.b16 %v93
    %v266 = vunpack.c.h.b16 %v93
    %v267 = vunpack.c.l.b16 %v94
    %v268 = vunpack.c.h.b16 %v94
    %v269 = vunpack.c.l.b16 %v95
    %v270 = vunpack.c.h.b16 %v95
    %v271 = vunpack.c.l.b16 %v96
    %v272 = vunpack.c.h.b16 %v96
    %v273 = vunpack.c.l.b16 %v97
    %v274 = vunpack.c.h.b16 %v97
    %v275 = vunpack.c.l.b16 %v98
    %v276 = vunpack.c.h.b16 %v98
    %v277 = vunpack.c.l.b16 %v99
    %v278 = vunpack.c.h.b16 %v99
    %v279 = vunpack.c.l.b16 %v100
    %v280 = vunpack.c.h.b16 %v100
    %v281 = vunpack.c.l.b16 %v101
    %v282 = vunpack.c.h.b16 %v101
    %v283 = vunpack.c.l.b16 %v102
    %v284 = vunpack.c.h.b16 %v102
    %v285 = vunpack.c.l.b16 %v103
    %v286 = vunpack.c.h.b16 %v103
    %v287 = vunpack.c.l.b16 %v104
    %v288 = vunpack.c.h.b16 %v104
    %v289 = vunpack.c.l.b16 %v105
    %v290 = vunpack.c.h.b16 %v105
    %v291 = vunpack.c.l.b16 %v106
    %v292 = vunpack.c.h.b16 %v106
    %v293 = vunpack.c.l.b16 %v107
    %v294 = vunpack.c.h.b16 %v107
    %v295 = vunpack.c.l.b16 %v108
    %v296 = vunpack.c.h.b16 %v108
    %v297 = vunpack.c.l.b16 %v109
    %v298 = vunpack.c.h.b16 %v109
    %v299 = vunpack.c.l.b16 %v110
    %v300 = vunpack.c.h.b16 %v110
    %v301 = vunpack.c.l.b16 %v111
    %v302 = vunpack.c.h.b16 %v111
    %v303 = vunpack.c.l.b16 %v112
    %v304 = vunpack.c.h.b16 %v112
    %v305 = vunpack.c.l.b16 %v113
    %v306 = vunpack.c.h.b16 %v113
    %v307 = vunpack.c.l.b16 %v114
    %v308 = vunpack.c.h.b16 %v114
    %v309 = vunpack.c.l.b16 %v115
    %v310 = vunpack.c.h.b16 %v115
    %v311 = vunpack.c.l.b16 %v116
    %v312 = vunpack.c.h.b16 %v116
    %v313 = vunpack.c.l.b16 %v117
    %v314 = vunpack.c.h.b16 %v117
    %v315 = vunpack.c.l.b16 %v118
    %v316 = vunpack.c.h.b16 %v118
    %v317 = vunpack.c.l.b16 %v119
    %v318 = vunpack.c.h.b16 %v119
    %v319 = vunpack.c.l.b16 %v120
    %v320 = vunpack.c.h.b16 %v120
    %v321 = vunpack.c.l.b16 %v121
    %v322 = vunpack.c.h.b16 %v121
    %v323 = vunpack.c.l.b16 %v122
    %v324 = vunpack.c.h.b16 %v122
    %v325 = vunpack.c.l.b16 %v123
    %v326 = vunpack.c.h.b16 %v123
    %v327 = vunpack.c.l.b16 %v124
    %v328 = vunpack.c.h.b16 %v124
    %v329 = vunpack.c.l.b16 %v125
    %v330 = vunpack.c.h.b16 %v125
    %v331 = vunpack.c.l.b16 %v126
    %v332 = vunpack.c.h.b16 %v126
    %v333 = vunpack.c.l.b16 %v127
    %v334 = vunpack.c.h.b16 %v127
    %v335 = vunpack.c.l.b16 %v128
    %v336 = vunpack.c.h.b16 %v128
    %v337 = vunpack.c.l.b16 %v129
    %v338 = vunpack.c.h.b16 %v129
    %v339 = vunpack.c.l.b16 %v130
    %v340 = vunpack.c.h.b16 %v130
    %v341 = vunpack.c.l.b16 %v131
    %v342 = vunpack.c.h.b16 %v131
    %v343 = vunpack.c.l.b16 %v132
    %v344 = vunpack.c.h.b16 %v132
    %v345 = vunpack.c.l.b16 %v133
    %v346 = vunpack.c.h.b16 %v133
    %v347 = vunpack.c.l.b16 %v134
    %v348 = vunpack.c.h.b16 %v134
    %v349 = vunpack.c.l.b16 %v135
    %v350 = vunpack.c.h.b16 %v135
    %v351 = vunpack.c.l.b16 %v136
    %v352 = vunpack.c.h.b16 %v136
    %v353 = vunpack.c.l.b16 %v137
    %v354 = vunpack.c.h.b16 %v137
    %v355 = vunpack.c.l.b16 %v138
    %v356 = vunpack.c.h.b16 %v138
    %v357 = vunpack.c.l.b16 %v139
    %v358 = vunpack.c.h.b16 %v139
    %v359 = vunpack.c.l.b16 %v140
    %v360 = vunpack.c.h.b16 %v140
    %v361 = vunpack.c.l.b16 %v141
    %v362 = vunpack.c.h.b16 %v141
    %v363 = vpack.c.b16 %v237, %v219
    %v364 = vpack.c.b16 %v238, %v220
    %v365 = vpack.c.b16 %v239, %v221
    %v366 = vpack.c.b16 %v240, %v222
    %v367 = vpack.c.b16 %v241, %v223
    %v368 = vpack.c.b16 %v242, %v224
    %v369 = vpack.c.b16 %v243, %v225
    %v370 = vpack.c.b16 %v244, %v226
    %v371 = vpack.c.b16 %v245, %v227
    %v372 = vpack.c.b16 %v246, %v228
    %v373 = vpack.c.b16 %v247, %v229
    %v374 = vpack.c.b16 %v248, %v230
    %v375 = vpack.c.b16 %v249, %v231
    %v376 = vpack.c.b16 %v250, %v232
    %v377 = vpack.c.b16 %v251, %v233
    %v378 = vpack.c.b16 %v252, %v234
    %v379 = vpack.c.b16 %v253, %v235
    %v380 = vpack.c.b16 %v254, %v236
    %v381 = vpack.c.b16 %v273, %v255
    %v382 = vpack.c.b16 %v274, %v256
    %v383 = vpack.c.b16 %v275, %v257
    %v384 = vpack.c.b16 %v276, %v258
    %v385 = vpack.c.b16 %v277, %v259
    %v386 = vpack.c.b16 %v278, %v260
    %v387 = vpack.c.b16 %v279, %v261
    %v388 = vpack.c.b16 %v280, %v262
    %v389 = vpack.c.b16 %v281, %v263
    %v390 = vpack.c.b16 %v282, %v264
    %v391 = vpack.c.b16 %v283, %v265
    %v392 = vpack.c.b16 %v284, %v266
    %v393 = vpack.c.b16 %v285, %v267
    %v394 = vpack.c.b16 %v286, %v268
    %v395 = vpack.c.b16 %v287, %v269
    %v396 = vpack.c.b16 %v288, %v270
    %v397 = vpack.c.b16 %v289, %v271
    %v398 = vpack.c.b16 %v290, %v272
    %v399 = vpack.c.b16 %v309, %v291
    %v400 = vpack.c.b16 %v310, %v292
    %v401 = vpack.c.b16 %v311, %v293
    %v402 = vpack.c.b16 %v312, %v294
    %v403 = vpack.c.b16 %v313, %v295
    %v404 = vpack.c.b16 %v314, %v296
    %v405 = vpack.c.b16 %v315, %v297
    %v406 = vpack.c.b16 %v316, %v298
    %v407 = vpack.c.b16 %v317, %v299
    %v408 = vpack.c.b16 %v318, %v300
    %v409 = vpack.c.b16 %v319, %v301
    %v410 = vpack.c.b16 %v320, %v302
    %v411 = vpack.c.b16 %v321, %v303
    %v412 = vpack.c.b16 %v322, %v304
    %v413 = vpack.c.b16 %v323, %v305
    %v414 = vpack.c.b16 %v324, %v306
    %v415 = vpack.c.b16 %v325, %v307
    %v416 = vpack.c.b16 %v326, %v308
    %v417 = vpack.c.b16 %v345, %v327
    %v418 = vpack.c.b16 %v346, %v328
    %v419 = vpack.c.b16 %v347, %v329
    %v420 = vpack.c.b16 %v348, %v330
    %v421 = vpack.c.b16 %v349, %v331
    %v422 = vpack.c.b16 %v350, %v332
    %v423 = vpack.c.b16 %v351, %v333
    %v424 = vpack.c.b16 %v352, %v334
    %v425 = vpack.c.b16 %v353, %v335
    %v426 = vpack.c.b16 %v354, %v336
    %v427 = vpack.c.b16 %v355, %v337
    %v428 = vpack.c.b16 %v356, %v338
    %v429 = vpack.c.b16 %v357, %v339
    %v430 = vpack.c.b16 %v358, %v340
    %v431 = vpack.c.b16 %v359, %v341
    %v432 = vpack.c.b16 %v360, %v342
    %v433 = vpack.c.b16 %v361, %v343
    %v434 = vpack.c.b16 %v362, %v344
    %vm507 = vcmask 523264
    %v509 = vsel %vm507, %v146, 0
    %511 = vmatprep.subr.bf16.mxu0 %v364
    %512 = vmatpush1.bf16.msra.mxu0 %v363
    %513 = vmatprep.subr.bf16.mxu0 %v382
    %514 = vmatpush1.bf16.msra.mxu0 %v381
    %515 = vmatprep.subr.bf16.mxu0 %v400
    %516 = vmatpush1.bf16.msra.mxu0 %v399
    %517 = vmatprep.subr.bf16.mxu0 %v418
    %518 = vmatpush1.bf16.msra.mxu0 %v417
    %519 = vmatprep.subr.bf16.mxu0 0
    %520 = vmatpush1.bf16.msra.mxu0 0
    %521 = vmatprep.subr.bf16.mxu0 0
    %522 = vmatpush1.bf16.msra.mxu0 0
    %523 = vmatprep.subr.bf16.mxu0 0
    %524 = vmatpush1.bf16.msra.mxu0 0
    %525 = vmatprep.subr.bf16.mxu0 0
    %526 = vmatpush1.bf16.msra.mxu0 0
    %527 = vmatprep.subr.bf16.mxu0 0
    %528 = vmatpush1.bf16.msra.mxu0 0
    %529 = vmatprep.subr.bf16.mxu0 0
    %530 = vmatpush1.bf16.msra.mxu0 0
    %531 = vmatprep.subr.bf16.mxu0 0
    %532 = vmatpush1.bf16.msra.mxu0 0
    %533 = vmatprep.subr.bf16.mxu0 0
    %534 = vmatpush1.bf16.msra.mxu0 0
    %535 = vmatprep.subr.bf16.mxu0 0
    %536 = vmatpush1.bf16.msra.mxu0 0
    %537 = vmatprep.subr.bf16.mxu0 0
    %538 = vmatpush1.bf16.msra.mxu0 0
    %539 = vmatprep.subr.bf16.mxu0 0
    %540 = vmatpush1.bf16.msra.mxu0 0
    %541 = vmatprep.subr.bf16.mxu0 0
    %542 = vmatpush1.bf16.msra.mxu0 0
    %543 = vmatprep.mubr.bf16.mxu0 0
    %544 = vmatmul.mubr.bf16.gmra.mrb[0].mxu0 %v509
    %v545 = vpop.f32.mrb[0].mxu0
    %v546 = vadd.f32 0.0, %v545
    %v547 = vpop.f32.mrb[0].mxu0
    %v548 = vadd.f32 0.0, %v547
    %v549 = vpop.f32.mrb[0].mxu0
    %v550 = vadd.f32 0.0, %v549
    %v551 = vpop.f32.mrb[0].mxu0
    %v552 = vadd.f32 0.0, %v551
    %553 = vdwg.mxu0
    %554 = vmatprep.subr.bf16.mxu0 %v366
    %555 = vmatpush1.bf16.msra.mxu0 %v365
    %556 = vmatprep.subr.bf16.mxu0 %v384
    %557 = vmatpush1.bf16.msra.mxu0 %v383
    %558 = vmatprep.subr.bf16.mxu0 %v402
    %559 = vmatpush1.bf16.msra.mxu0 %v401
    %560 = vmatprep.subr.bf16.mxu0 %v420
    %561 = vmatpush1.bf16.msra.mxu0 %v419
    %562 = vmatprep.subr.bf16.mxu0 0
    %563 = vmatpush1.bf16.msra.mxu0 0
    %564 = vmatprep.subr.bf16.mxu0 0
    %565 = vmatpush1.bf16.msra.mxu0 0
    %566 = vmatprep.subr.bf16.mxu0 0
    %567 = vmatpush1.bf16.msra.mxu0 0
    %568 = vmatprep.subr.bf16.mxu0 0
    %569 = vmatpush1.bf16.msra.mxu0 0
    %570 = vmatprep.subr.bf16.mxu0 0
    %571 = vmatpush1.bf16.msra.mxu0 0
    %572 = vmatprep.subr.bf16.mxu0 0
    %573 = vmatpush1.bf16.msra.mxu0 0
    %574 = vmatprep.subr.bf16.mxu0 0
    %575 = vmatpush1.bf16.msra.mxu0 0
    %576 = vmatprep.subr.bf16.mxu0 0
    %577 = vmatpush1.bf16.msra.mxu0 0
    %578 = vmatprep.subr.bf16.mxu0 0
    %579 = vmatpush1.bf16.msra.mxu0 0
    %580 = vmatprep.subr.bf16.mxu0 0
    %581 = vmatpush1.bf16.msra.mxu0 0
    %582 = vmatprep.subr.bf16.mxu0 0
    %583 = vmatpush1.bf16.msra.mxu0 0
    %584 = vmatprep.subr.bf16.mxu0 0
    %585 = vmatpush1.bf16.msra.mxu0 0
    %586 = vmatprep.mubr.bf16.mxu0 0
    %587 = vmatmul.mubr.bf16.gmra.mrb[0].mxu0 %v509
    %v588 = vpop.f32.mrb[0].mxu0
    %v589 = vadd.f32 0.0, %v588
    %v590 = vpop.f32.mrb[0].mxu0
    %v591 = vadd.f32 0.0, %v590
    %v592 = vpop.f32.mrb[0].mxu0
    %v593 = vadd.f32 0.0, %v592
    %v594 = vpop.f32.mrb[0].mxu0
    %v595 = vadd.f32 0.0, %v594
    %596 = vdwg.mxu0
    %597 = vmatprep.subr.bf16.mxu0 %v368
    %598 = vmatpush1.bf16.msra.mxu0 %v367
    %599 = vmatprep.subr.bf16.mxu0 %v386
    %600 = vmatpush1.bf16.msra.mxu0 %v385
    %601 = vmatprep.subr.bf16.mxu0 %v404
    %602 = vmatpush1.bf16.msra.mxu0 %v403
    %603 = vmatprep.subr.bf16.mxu0 %v422
    %604 = vmatpush1.bf16.msra.mxu0 %v421
    %605 = vmatprep.subr.bf16.mxu0 0
    %606 = vmatpush1.bf16.msra.mxu0 0
    %607 = vmatprep.subr.bf16.mxu0 0
    %608 = vmatpush1.bf16.msra.mxu0 0
    %609 = vmatprep.subr.bf16.mxu0 0
    %610 = vmatpush1.bf16.msra.mxu0 0
    %611 = vmatprep.subr.bf16.mxu0 0
    %612 = vmatpush1.bf16.msra.mxu0 0
    %613 = vmatprep.subr.bf16.mxu0 0
    %614 = vmatpush1.bf16.msra.mxu0 0
    %615 = vmatprep.subr.bf16.mxu0 0
    %616 = vmatpush1.bf16.msra.mxu0 0
    %617 = vmatprep.subr.bf16.mxu0 0
    %618 = vmatpush1.bf16.msra.mxu0 0
    %619 = vmatprep.subr.bf16.mxu0 0
    %620 = vmatpush1.bf16.msra.mxu0 0
    %621 = vmatprep.subr.bf16.mxu0 0
    %622 = vmatpush1.bf16.msra.mxu0 0
    %623 = vmatprep.subr.bf16.mxu0 0
    %624 = vmatpush1.bf16.msra.mxu0 0
    %625 = vmatprep.subr.bf16.mxu0 0
    %626 = vmatpush1.bf16.msra.mxu0 0
    %627 = vmatprep.subr.bf16.mxu0 0
    %628 = vmatpush1.bf16.msra.mxu0 0
    %629 = vmatprep.mubr.bf16.mxu0 0
    %630 = vmatmul.mubr.bf16.gmra.mrb[0].mxu0 %v509
    %v631 = vpop.f32.mrb[0].mxu0
    %v632 = vadd.f32 0.0, %v631
    %v633 = vpop.f32.mrb[0].mxu0
    %v634 = vadd.f32 0.0, %v633
    %v635 = vpop.f32.mrb[0].mxu0
    %v636 = vadd.f32 0.0, %v635
    %v637 = vpop.f32.mrb[0].mxu0
    %v638 = vadd.f32 0.0, %v637
    %639 = vdwg.mxu0
    %640 = vmatprep.subr.bf16.mxu0 %v370
    %641 = vmatpush1.bf16.msra.mxu0 %v369
    %642 = vmatprep.subr.bf16.mxu0 %v388
    %643 = vmatpush1.bf16.msra.mxu0 %v387
    %644 = vmatprep.subr.bf16.mxu0 %v406
    %645 = vmatpush1.bf16.msra.mxu0 %v405
    %646 = vmatprep.subr.bf16.mxu0 %v424
    %647 = vmatpush1.bf16.msra.mxu0 %v423
    %648 = vmatprep.subr.bf16.mxu0 0
    %649 = vmatpush1.bf16.msra.mxu0 0
    %650 = vmatprep.subr.bf16.mxu0 0
    %651 = vmatpush1.bf16.msra.mxu0 0
    %652 = vmatprep.subr.bf16.mxu0 0
    %653 = vmatpush1.bf16.msra.mxu0 0
    %654 = vmatprep.subr.bf16.mxu0 0
    %655 = vmatpush1.bf16.msra.mxu0 0
    %656 = vmatprep.subr.bf16.mxu0 0
    %657 = vmatpush1.bf16.msra.mxu0 0
    %658 = vmatprep.subr.bf16.mxu0 0
    %659 = vmatpush1.bf16.msra.mxu0 0
    %660 = vmatprep.subr.bf16.mxu0 0
    %661 = vmatpush1.bf16.msra.mxu0 0
    %662 = vmatprep.subr.bf16.mxu0 0
    %663 = vmatpush1.bf16.msra.mxu0 0
    %664 = vmatprep.subr.bf16.mxu0 0
    %665 = vmatpush1.bf16.msra.mxu0 0
    %666 = vmatprep.subr.bf16.mxu0 0
    %667 = vmatpush1.bf16.msra.mxu0 0
    %668 = vmatprep.subr.bf16.mxu0 0
    %669 = vmatpush1.bf16.msra.mxu0 0
    %670 = vmatprep.subr.bf16.mxu0 0
    %671 = vmatpush1.bf16.msra.mxu0 0
    %672 = vmatprep.mubr.bf16.mxu0 0
    %673 = vmatmul.mubr.bf16.gmra.mrb[0].mxu0 %v509
    %v674 = vpop.f32.mrb[0].mxu0
    %v675 = vadd.f32 0.0, %v674
    %v676 = vpop.f32.mrb[0].mxu0
    %v677 = vadd.f32 0.0, %v676
    %v678 = vpop.f32.mrb[0].mxu0
    %v679 = vadd.f32 0.0, %v678
    %v680 = vpop.f32.mrb[0].mxu0
    %v681 = vadd.f32 0.0, %v680
    %682 = vdwg.mxu0
    %683 = vmatprep.subr.bf16.mxu0 %v372
    %684 = vmatpush1.bf16.msra.mxu0 %v371
    %685 = vmatprep.subr.bf16.mxu0 %v390
    %686 = vmatpush1.bf16.msra.mxu0 %v389
    %687 = vmatprep.subr.bf16.mxu0 %v408
    %688 = vmatpush1.bf16.msra.mxu0 %v407
    %689 = vmatprep.subr.bf16.mxu0 %v426
    %690 = vmatpush1.bf16.msra.mxu0 %v425
    %691 = vmatprep.subr.bf16.mxu0 0
    %692 = vmatpush1.bf16.msra.mxu0 0
    %693 = vmatprep.subr.bf16.mxu0 0
    %694 = vmatpush1.bf16.msra.mxu0 0
    %695 = vmatprep.subr.bf16.mxu0 0
    %696 = vmatpush1.bf16.msra.mxu0 0
    %697 = vmatprep.subr.bf16.mxu0 0
    %698 = vmatpush1.bf16.msra.mxu0 0
    %699 = vmatprep.subr.bf16.mxu0 0
    %700 = vmatpush1.bf16.msra.mxu0 0
    %701 = vmatprep.subr.bf16.mxu0 0
    %702 = vmatpush1.bf16.msra.mxu0 0
    %703 = vmatprep.subr.bf16.mxu0 0
    %704 = vmatpush1.bf16.msra.mxu0 0
    %705 = vmatprep.subr.bf16.mxu0 0
    %706 = vmatpush1.bf16.msra.mxu0 0
    %707 = vmatprep.subr.bf16.mxu0 0
    %708 = vmatpush1.bf16.msra.mxu0 0
    %709 = vmatprep.subr.bf16.mxu0 0
    %710 = vmatpush1.bf16.msra.mxu0 0
    %711 = vmatprep.subr.bf16.mxu0 0
    %712 = vmatpush1.bf16.msra.mxu0 0
    %713 = vmatprep.subr.bf16.mxu0 0
    %714 = vmatpush1.bf16.msra.mxu0 0
    %715 = vmatprep.mubr.bf16.mxu0 0
    %716 = vmatmul.mubr.bf16.gmra.mrb[0].mxu0 %v509
    %v717 = vpop.f32.mrb[0].mxu0
    %v718 = vadd.f32 0.0, %v717
    %v719 = vpop.f32.mrb[0].mxu0
    %v720 = vadd.f32 0.0, %v719
    %v721 = vpop.f32.mrb[0].mxu0
    %v722 = vadd.f32 0.0, %v721
    %v723 = vpop.f32.mrb[0].mxu0
    %v724 = vadd.f32 0.0, %v723
    %725 = vdwg.mxu0
    %726 = vmatprep.subr.bf16.mxu0 %v374
    %727 = vmatpush1.bf16.msra.mxu0 %v373
    %728 = vmatprep.subr.bf16.mxu0 %v392
    %729 = vmatpush1.bf16.msra.mxu0 %v391
    %730 = vmatprep.subr.bf16.mxu0 %v410
    %731 = vmatpush1.bf16.msra.mxu0 %v409
    %732 = vmatprep.subr.bf16.mxu0 %v428
    %733 = vmatpush1.bf16.msra.mxu0 %v427
    %734 = vmatprep.subr.bf16.mxu0 0
    %735 = vmatpush1.bf16.msra.mxu0 0
    %736 = vmatprep.subr.bf16.mxu0 0
    %737 = vmatpush1.bf16.msra.mxu0 0
    %738 = vmatprep.subr.bf16.mxu0 0
    %739 = vmatpush1.bf16.msra.mxu0 0
    %740 = vmatprep.subr.bf16.mxu0 0
    %741 = vmatpush1.bf16.msra.mxu0 0
    %742 = vmatprep.subr.bf16.mxu0 0
    %743 = vmatpush1.bf16.msra.mxu0 0
    %744 = vmatprep.subr.bf16.mxu0 0
    %745 = vmatpush1.bf16.msra.mxu0 0
    %746 = vmatprep.subr.bf16.mxu0 0
    %747 = vmatpush1.bf16.msra.mxu0 0
    %748 = vmatprep.subr.bf16.mxu0 0
    %749 = vmatpush1.bf16.msra.mxu0 0
    %750 = vmatprep.subr.bf16.mxu0 0
    %751 = vmatpush1.bf16.msra.mxu0 0
    %752 = vmatprep.subr.bf16.mxu0 0
    %753 = vmatpush1.bf16.msra.mxu0 0
    %754 = vmatprep.subr.bf16.mxu0 0
    %755 = vmatpush1.bf16.msra.mxu0 0
    %756 = vmatprep.subr.bf16.mxu0 0
    %757 = vmatpush1.bf16.msra.mxu0 0
    %758 = vmatprep.mubr.bf16.mxu0 0
    %759 = vmatmul.mubr.bf16.gmra.mrb[0].mxu0 %v509
    %v760 = vpop.f32.mrb[0].mxu0
    %v761 = vadd.f32 0.0, %v760
    %v762 = vpop.f32.mrb[0].mxu0
    %v763 = vadd.f32 0.0, %v762
    %v764 = vpop.f32.mrb[0].mxu0
    %v765 = vadd.f32 0.0, %v764
    %v766 = vpop.f32.mrb[0].mxu0
    %v767 = vadd.f32 0.0, %v766
    %768 = vdwg.mxu0
    %769 = vmatprep.subr.bf16.mxu0 %v376
    %770 = vmatpush1.bf16.msra.mxu0 %v375
    %771 = vmatprep.subr.bf16.mxu0 %v394
    %772 = vmatpush1.bf16.msra.mxu0 %v393
    %773 = vmatprep.subr.bf16.mxu0 %v412
    %774 = vmatpush1.bf16.msra.mxu0 %v411
    %775 = vmatprep.subr.bf16.mxu0 %v430
    %776 = vmatpush1.bf16.msra.mxu0 %v429
    %777 = vmatprep.subr.bf16.mxu0 0
    %778 = vmatpush1.bf16.msra.mxu0 0
    %779 = vmatprep.subr.bf16.mxu0 0
    %780 = vmatpush1.bf16.msra.mxu0 0
    %781 = vmatprep.subr.bf16.mxu0 0
    %782 = vmatpush1.bf16.msra.mxu0 0
    %783 = vmatprep.subr.bf16.mxu0 0
    %784 = vmatpush1.bf16.msra.mxu0 0
    %785 = vmatprep.subr.bf16.mxu0 0
    %786 = vmatpush1.bf16.msra.mxu0 0
    %787 = vmatprep.subr.bf16.mxu0 0
    %788 = vmatpush1.bf16.msra.mxu0 0
    %789 = vmatprep.subr.bf16.mxu0 0
    %790 = vmatpush1.bf16.msra.mxu0 0
    %791 = vmatprep.subr.bf16.mxu0 0
    %792 = vmatpush1.bf16.msra.mxu0 0
    %793 = vmatprep.subr.bf16.mxu0 0
    %794 = vmatpush1.bf16.msra.mxu0 0
    %795 = vmatprep.subr.bf16.mxu0 0
    %796 = vmatpush1.bf16.msra.mxu0 0
    %797 = vmatprep.subr.bf16.mxu0 0
    %798 = vmatpush1.bf16.msra.mxu0 0
    %799 = vmatprep.subr.bf16.mxu0 0
    %800 = vmatpush1.bf16.msra.mxu0 0
    %801 = vmatprep.mubr.bf16.mxu0 0
    %802 = vmatmul.mubr.bf16.gmra.mrb[0].mxu0 %v509
    %v803 = vpop.f32.mrb[0].mxu0
    %v804 = vadd.f32 0.0, %v803
    %v805 = vpop.f32.mrb[0].mxu0
    %v806 = vadd.f32 0.0, %v805
    %v807 = vpop.f32.mrb[0].mxu0
    %v808 = vadd.f32 0.0, %v807
    %v809 = vpop.f32.mrb[0].mxu0
    %v810 = vadd.f32 0.0, %v809
    %811 = vdwg.mxu0
    %812 = vmatprep.subr.bf16.mxu0 %v378
    %813 = vmatpush1.bf16.msra.mxu0 %v377
    %814 = vmatprep.subr.bf16.mxu0 %v396
    %815 = vmatpush1.bf16.msra.mxu0 %v395
    %816 = vmatprep.subr.bf16.mxu0 %v414
    %817 = vmatpush1.bf16.msra.mxu0 %v413
    %818 = vmatprep.subr.bf16.mxu0 %v432
    %819 = vmatpush1.bf16.msra.mxu0 %v431
    %820 = vmatprep.subr.bf16.mxu0 0
    %821 = vmatpush1.bf16.msra.mxu0 0
    %822 = vmatprep.subr.bf16.mxu0 0
    %823 = vmatpush1.bf16.msra.mxu0 0
    %824 = vmatprep.subr.bf16.mxu0 0
    %825 = vmatpush1.bf16.msra.mxu0 0
    %826 = vmatprep.subr.bf16.mxu0 0
    %827 = vmatpush1.bf16.msra.mxu0 0
    %828 = vmatprep.subr.bf16.mxu0 0
    %829 = vmatpush1.bf16.msra.mxu0 0
    %830 = vmatprep.subr.bf16.mxu0 0
    %831 = vmatpush1.bf16.msra.mxu0 0
    %832 = vmatprep.subr.bf16.mxu0 0
    %833 = vmatpush1.bf16.msra.mxu0 0
    %834 = vmatprep.subr.bf16.mxu0 0
    %835 = vmatpush1.bf16.msra.mxu0 0
    %836 = vmatprep.subr.bf16.mxu0 0
    %837 = vmatpush1.bf16.msra.mxu0 0
    %838 = vmatprep.subr.bf16.mxu0 0
    %839 = vmatpush1.bf16.msra.mxu0 0
    %840 = vmatprep.subr.bf16.mxu0 0
    %841 = vmatpush1.bf16.msra.mxu0 0
    %842 = vmatprep.subr.bf16.mxu0 0
    %843 = vmatpush1.bf16.msra.mxu0 0
    %844 = vmatprep.mubr.bf16.mxu0 0
    %845 = vmatmul.mubr.bf16.gmra.mrb[0].mxu0 %v509
    %v846 = vpop.f32.mrb[0].mxu0
    %v847 = vadd.f32 0.0, %v846
    %v848 = vpop.f32.mrb[0].mxu0
    %v849 = vadd.f32 0.0, %v848
    %v850 = vpop.f32.mrb[0].mxu0
    %v851 = vadd.f32 0.0, %v850
    %v852 = vpop.f32.mrb[0].mxu0
    %v853 = vadd.f32 0.0, %v852
    %854 = vdwg.mxu0
    %855 = vmatprep.subr.bf16.mxu0 %v380
    %856 = vmatpush1.bf16.msra.mxu0 %v379
    %857 = vmatprep.subr.bf16.mxu0 %v398
    %858 = vmatpush1.bf16.msra.mxu0 %v397
    %859 = vmatprep.subr.bf16.mxu0 %v416
    %860 = vmatpush1.bf16.msra.mxu0 %v415
    %861 = vmatprep.subr.bf16.mxu0 %v434
    %862 = vmatpush1.bf16.msra.mxu0 %v433
    %863 = vmatprep.subr.bf16.mxu0 0
    %864 = vmatpush1.bf16.msra.mxu0 0
    %865 = vmatprep.subr.bf16.mxu0 0
    %866 = vmatpush1.bf16.msra.mxu0 0
    %867 = vmatprep.subr.bf16.mxu0 0
    %868 = vmatpush1.bf16.msra.mxu0 0
    %869 = vmatprep.subr.bf16.mxu0 0
    %870 = vmatpush1.bf16.msra.mxu0 0
    %871 = vmatprep.subr.bf16.mxu0 0
    %872 = vmatpush1.bf16.msra.mxu0 0
    %873 = vmatprep.subr.bf16.mxu0 0
    %874 = vmatpush1.bf16.msra.mxu0 0
    %875 = vmatprep.subr.bf16.mxu0 0
    %876 = vmatpush1.bf16.msra.mxu0 0
    %877 = vmatprep.subr.bf16.mxu0 0
    %878 = vmatpush1.bf16.msra.mxu0 0
    %879 = vmatprep.subr.bf16.mxu0 0
    %880 = vmatpush1.bf16.msra.mxu0 0
    %881 = vmatprep.subr.bf16.mxu0 0
    %882 = vmatpush1.bf16.msra.mxu0 0
    %883 = vmatprep.subr.bf16.mxu0 0
    %884 = vmatpush1.bf16.msra.mxu0 0
    %885 = vmatprep.subr.bf16.mxu0 0
    %886 = vmatpush1.bf16.msra.mxu0 0
    %887 = vmatprep.mubr.bf16.mxu0 0
    %888 = vmatmul.mubr.bf16.gmra.mrb[0].mxu0 %v509
    %v889 = vpop.f32.mrb[0].mxu0
    %v890 = vadd.f32 0.0, %v889
    %v891 = vpop.f32.mrb[0].mxu0
    %v892 = vadd.f32 0.0, %v891
    %v893 = vpop.f32.mrb[0].mxu0
    %v894 = vadd.f32 0.0, %v893
    %v895 = vpop.f32.mrb[0].mxu0
    %v896 = vadd.f32 0.0, %v895
    %897 = vdwg.mxu0
    %v898 = vmax.f32 %v546, %v720
    %v899 = vmax.f32 %v548, %v761
    %v900 = vmax.f32 %v589, %v763
    %v901 = vmax.f32 %v591, %v804
    %v902 = vmax.f32 %v632, %v806
    %v903 = vmax.f32 %v634, %v847
    %v904 = vmax.f32 %v675, %v849
    %v905 = vmax.f32 %v677, %v890
    %v906 = vmax.f32 %v718, %v892
    %v907 = vmax.f32 %v550, %v724
    %v908 = vmax.f32 %v552, %v765
    %v909 = vmax.f32 %v593, %v767
    %v910 = vmax.f32 %v595, %v808
    %v911 = vmax.f32 %v636, %v810
    %v912 = vmax.f32 %v638, %v851
    %v913 = vmax.f32 %v679, %v853
    %v914 = vmax.f32 %v681, %v894
    %v915 = vmax.f32 %v722, %v896
    %v916 = vld [vmem:[%s2] sm:$0xff]
    %v917 = vld [vmem:[%s2 + $0x8] sm:$0x1]
    %v920 = vlaneseq
    %v921 = vshrl.u32 %v920, 7
    %v922 = vsub.s32 0, %v921
    %v923 = vrot.slane %v916, %v922
    %v924 = vlaneseq
    %v925 = vshrl.u32 %v924, 7
    %v926 = vsub.s32 1, %v925
    %v927 = vrot.slane %v916, %v926
    %v928 = vlaneseq
    %v929 = vshrl.u32 %v928, 7
    %v930 = vsub.s32 2, %v929
    %v931 = vrot.slane %v916, %v930
    %v932 = vlaneseq
    %v933 = vshrl.u32 %v932, 7
    %v934 = vsub.s32 3, %v933
    %v935 = vrot.slane %v916, %v934
    %v936 = vlaneseq
    %v937 = vshrl.u32 %v936, 7
    %v938 = vsub.s32 4, %v937
    %v939 = vrot.slane %v916, %v938
    %v940 = vlaneseq
    %v941 = vshrl.u32 %v940, 7
    %v942 = vsub.s32 5, %v941
    %v943 = vrot.slane %v916, %v942
    %v944 = vlaneseq
    %v945 = vshrl.u32 %v944, 7
    %v946 = vsub.s32 6, %v945
    %v947 = vrot.slane %v916, %v946
    %v948 = vlaneseq
    %v949 = vshrl.u32 %v948, 7
    %v950 = vsub.s32 7, %v949
    %v951 = vrot.slane %v916, %v950
    %v952 = vlaneseq
    %v953 = vshrl.u32 %v952, 7
    %v954 = vsub.s32 0, %v953
    %v955 = vrot.slane %v917, %v954
    %v965 = vadd.f32 %v898, %v923
    %v966 = vadd.f32 %v899, %v927
    %v967 = vadd.f32 %v900, %v931
    %v968 = vadd.f32 %v901, %v935
    %v969 = vadd.f32 %v902, %v939
    %v970 = vadd.f32 %v903, %v943
    %v971 = vadd.f32 %v904, %v947
    %v972 = vadd.f32 %v905, %v951
    %v973 = vadd.f32 %v906, %v955
    %v974 = vadd.f32 %v907, %v923
    %v975 = vadd.f32 %v908, %v927
    %v976 = vadd.f32 %v909, %v931
    %v977 = vadd.f32 %v910, %v935
    %v978 = vadd.f32 %v911, %v939
    %v979 = vadd.f32 %v912, %v943
    %v980 = vadd.f32 %v913, %v947
    %v981 = vadd.f32 %v914, %v951
    %v982 = vadd.f32 %v915, %v955
    %v983 = vmax.f32 %v965, 0.0
    %v984 = vmax.f32 %v966, 0.0
    %v985 = vmax.f32 %v967, 0.0
    %v986 = vmax.f32 %v968, 0.0
    %v987 = vmax.f32 %v969, 0.0
    %v988 = vmax.f32 %v970, 0.0
    %v989 = vmax.f32 %v971, 0.0
    %v990 = vmax.f32 %v972, 0.0
    %v991 = vmax.f32 %v973, 0.0
    %v992 = vmax.f32 %v974, 0.0
    %v993 = vmax.f32 %v975, 0.0
    %v994 = vmax.f32 %v976, 0.0
    %v995 = vmax.f32 %v977, 0.0
    %v996 = vmax.f32 %v978, 0.0
    %v997 = vmax.f32 %v979, 0.0
    %v998 = vmax.f32 %v980, 0.0
    %v999 = vmax.f32 %v981, 0.0
    %v1000 = vmax.f32 %v982, 0.0
    %v1001 = vpack.c.bf16 %v992, %v983
    %v1002 = vpack.c.bf16 %v993, %v984
    %v1003 = vpack.c.bf16 %v994, %v985
    %v1004 = vpack.c.bf16 %v995, %v986
    %v1005 = vpack.c.bf16 %v996, %v987
    %v1006 = vpack.c.bf16 %v997, %v988
    %v1007 = vpack.c.bf16 %v998, %v989
    %v1008 = vpack.c.bf16 %v999, %v990
    %v1009 = vpack.c.bf16 %v1000, %v991
    %v1010 = vld [vmem:[#allocation4] sm:$0xff]
    %v1011 = vld [vmem:[#allocation4 + $0x8] sm:$0xff]
    %v1012 = vld [vmem:[#allocation4 + $0x10] sm:$0xff]
    %v1013 = vld [vmem:[#allocation4 + $0x18] sm:$0xff]
    %v1014 = vld [vmem:[#allocation4 + $0x20] sm:$0xff]
    %v1015 = vld [vmem:[#allocation4 + $0x28] sm:$0xff]
    %v1016 = vld [vmem:[#allocation4 + $0x30] sm:$0xff]
    %v1017 = vld [vmem:[#allocation4 + $0x38] sm:$0xff]
    %v1018 = vld [vmem:[#allocation4 + $0x40] sm:$0xff]
    %v1019 = vld [vmem:[#allocation4 + $0x48] sm:$0xff]
    %v1020 = vld [vmem:[#allocation4 + $0x50] sm:$0xff]
    %v1021 = vld [vmem:[#allocation4 + $0x58] sm:$0xff]
    %v1022 = vld [vmem:[#allocation4 + $0x60] sm:$0xff]
    %v1023 = vld [vmem:[#allocation4 + $0x68] sm:$0xff]
    %v1024 = vld [vmem:[#allocation4 + $0x70] sm:$0xff]
    %v1025 = vld [vmem:[#allocation4 + $0x78] sm:$0xff]
    %v1026 = vld [vmem:[#allocation4 + $0x80] sm:$0xff]
    %v1027 = vld [vmem:[#allocation4 + $0x88] sm:$0xff]
    %v1028 = vld [vmem:[#allocation4 + $0x90] sm:$0xff]
    %v1029 = vld [vmem:[#allocation4 + $0x98] sm:$0xff]
    %v1030 = vld [vmem:[#allocation4 + $0xa0] sm:$0xff]
    %v1031 = vld [vmem:[#allocation4 + $0xa8] sm:$0xff]
    %v1032 = vld [vmem:[#allocation4 + $0xb0] sm:$0xff]
    %v1033 = vld [vmem:[#allocation4 + $0xb8] sm:$0xff]
    %v1034 = vld [vmem:[#allocation4 + $0xc0] sm:$0xff]
    %v1035 = vld [vmem:[#allocation4 + $0xc8] sm:$0xff]
    %v1036 = vld [vmem:[#allocation4 + $0xd0] sm:$0xff]
    %v1037 = vld [vmem:[#allocation4 + $0xd8] sm:$0xff]
    %v1038 = vld [vmem:[#allocation4 + $0xe0] sm:$0xff]
    %v1039 = vld [vmem:[#allocation4 + $0xe8] sm:$0xff]
    %v1040 = vld [vmem:[#allocation4 + $0xf0] sm:$0xff]
    %v1041 = vld [vmem:[#allocation4 + $0xf8] sm:$0xff]
    %v1042 = vld [vmem:[%s4] sm:$0x1]
    %v1075 = vunpack.c.l.b16 %v1010
    %v1076 = vunpack.c.h.b16 %v1010
    %v1077 = vunpack.c.l.b16 %v1011
    %v1078 = vunpack.c.h.b16 %v1011
    %v1079 = vunpack.c.l.b16 %v1012
    %v1080 = vunpack.c.h.b16 %v1012
    %v1081 = vunpack.c.l.b16 %v1013
    %v1082 = vunpack.c.h.b16 %v1013
    %v1083 = vunpack.c.l.b16 %v1014
    %v1084 = vunpack.c.h.b16 %v1014
    %v1085 = vunpack.c.l.b16 %v1015
    %v1086 = vunpack.c.h.b16 %v1015
    %v1087 = vunpack.c.l.b16 %v1016
    %v1088 = vunpack.c.h.b16 %v1016
    %v1089 = vunpack.c.l.b16 %v1017
    %v1090 = vunpack.c.h.b16 %v1017
    %v1091 = vunpack.c.l.b16 %v1018
    %v1092 = vunpack.c.h.b16 %v1018
    %v1093 = vunpack.c.l.b16 %v1019
    %v1094 = vunpack.c.h.b16 %v1019
    %v1095 = vunpack.c.l.b16 %v1020
    %v1096 = vunpack.c.h.b16 %v1020
    %v1097 = vunpack.c.l.b16 %v1021
    %v1098 = vunpack.c.h.b16 %v1021
    %v1099 = vunpack.c.l.b16 %v1022
    %v1100 = vunpack.c.h.b16 %v1022
    %v1101 = vunpack.c.l.b16 %v1023
    %v1102 = vunpack.c.h.b16 %v1023
    %v1103 = vunpack.c.l.b16 %v1024
    %v1104 = vunpack.c.h.b16 %v1024
    %v1105 = vunpack.c.l.b16 %v1025
    %v1106 = vunpack.c.h.b16 %v1025
    %v1107 = vunpack.c.l.b16 %v1026
    %v1108 = vunpack.c.h.b16 %v1026
    %v1109 = vunpack.c.l.b16 %v1027
    %v1110 = vunpack.c.h.b16 %v1027
    %v1111 = vunpack.c.l.b16 %v1028
    %v1112 = vunpack.c.h.b16 %v1028
    %v1113 = vunpack.c.l.b16 %v1029
    %v1114 = vunpack.c.h.b16 %v1029
    %v1115 = vunpack.c.l.b16 %v1030
    %v1116 = vunpack.c.h.b16 %v1030
    %v1117 = vunpack.c.l.b16 %v1031
    %v1118 = vunpack.c.h.b16 %v1031
    %v1119 = vunpack.c.l.b16 %v1032
    %v1120 = vunpack.c.h.b16 %v1032
    %v1121 = vunpack.c.l.b16 %v1033
    %v1122 = vunpack.c.h.b16 %v1033
    %v1123 = vunpack.c.l.b16 %v1034
    %v1124 = vunpack.c.h.b16 %v1034
    %v1125 = vunpack.c.l.b16 %v1035
    %v1126 = vunpack.c.h.b16 %v1035
    %v1127 = vunpack.c.l.b16 %v1036
    %v1128 = vunpack.c.h.b16 %v1036
    %v1129 = vunpack.c.l.b16 %v1037
    %v1130 = vunpack.c.h.b16 %v1037
    %v1131 = vunpack.c.l.b16 %v1038
    %v1132 = vunpack.c.h.b16 %v1038
    %v1133 = vunpack.c.l.b16 %v1039
    %v1134 = vunpack.c.h.b16 %v1039
    %v1135 = vunpack.c.l.b16 %v1040
    %v1136 = vunpack.c.h.b16 %v1040
    %v1137 = vunpack.c.l.b16 %v1041
    %v1138 = vunpack.c.h.b16 %v1041
    %v1139 = vpack.c.b16 %v1077, %v1075
    %v1140 = vpack.c.b16 %v1078, %v1076
    %v1141 = vpack.c.b16 %v1081, %v1079
    %v1142 = vpack.c.b16 %v1082, %v1080
    %v1143 = vpack.c.b16 %v1085, %v1083
    %v1144 = vpack.c.b16 %v1086, %v1084
    %v1145 = vpack.c.b16 %v1089, %v1087
    %v1146 = vpack.c.b16 %v1090, %v1088
    %v1147 = vpack.c.b16 %v1093, %v1091
    %v1148 = vpack.c.b16 %v1094, %v1092
    %v1149 = vpack.c.b16 %v1097, %v1095
    %v1150 = vpack.c.b16 %v1098, %v1096
    %v1151 = vpack.c.b16 %v1101, %v1099
    %v1152 = vpack.c.b16 %v1102, %v1100
    %v1153 = vpack.c.b16 %v1105, %v1103
    %v1154 = vpack.c.b16 %v1106, %v1104
    %v1155 = vpack.c.b16 %v1109, %v1107
    %v1156 = vpack.c.b16 %v1110, %v1108
    %v1157 = vpack.c.b16 %v1113, %v1111
    %v1158 = vpack.c.b16 %v1114, %v1112
    %v1159 = vpack.c.b16 %v1117, %v1115
    %v1160 = vpack.c.b16 %v1118, %v1116
    %v1161 = vpack.c.b16 %v1121, %v1119
    %v1162 = vpack.c.b16 %v1122, %v1120
    %v1163 = vpack.c.b16 %v1125, %v1123
    %v1164 = vpack.c.b16 %v1126, %v1124
    %v1165 = vpack.c.b16 %v1129, %v1127
    %v1166 = vpack.c.b16 %v1130, %v1128
    %v1167 = vpack.c.b16 %v1133, %v1131
    %v1168 = vpack.c.b16 %v1134, %v1132
    %v1169 = vpack.c.b16 %v1137, %v1135
    %v1170 = vpack.c.b16 %v1138, %v1136
    %1203 = vmatprep.subr.bf16.mxu0 %v1140
    %1204 = vmatpush1.bf16.msra.mxu0 %v1139
    %1205 = vmatprep.subr.bf16.mxu0 %v1142
    %1206 = vmatpush1.bf16.msra.mxu0 %v1141
    %1207 = vmatprep.subr.bf16.mxu0 %v1144
    %1208 = vmatpush1.bf16.msra.mxu0 %v1143
    %1209 = vmatprep.subr.bf16.mxu0 %v1146
    %1210 = vmatpush1.bf16.msra.mxu0 %v1145
    %1211 = vmatprep.subr.bf16.mxu0 %v1148
    %1212 = vmatpush1.bf16.msra.mxu0 %v1147
    %1213 = vmatprep.subr.bf16.mxu0 %v1150
    %1214 = vmatpush1.bf16.msra.mxu0 %v1149
    %1215 = vmatprep.subr.bf16.mxu0 %v1152
    %1216 = vmatpush1.bf16.msra.mxu0 %v1151
    %1217 = vmatprep.subr.bf16.mxu0 %v1154
    %1218 = vmatpush1.bf16.msra.mxu0 %v1153
    %1219 = vmatprep.subr.bf16.mxu0 %v1156
    %1220 = vmatpush1.bf16.msra.mxu0 %v1155
    %1221 = vmatprep.subr.bf16.mxu0 %v1158
    %1222 = vmatpush1.bf16.msra.mxu0 %v1157
    %1223 = vmatprep.subr.bf16.mxu0 %v1160
    %1224 = vmatpush1.bf16.msra.mxu0 %v1159
    %1225 = vmatprep.subr.bf16.mxu0 %v1162
    %1226 = vmatpush1.bf16.msra.mxu0 %v1161
    %1227 = vmatprep.subr.bf16.mxu0 %v1164
    %1228 = vmatpush1.bf16.msra.mxu0 %v1163
    %1229 = vmatprep.subr.bf16.mxu0 %v1166
    %1230 = vmatpush1.bf16.msra.mxu0 %v1165
    %1231 = vmatprep.subr.bf16.mxu0 %v1168
    %1232 = vmatpush1.bf16.msra.mxu0 %v1167
    %1233 = vmatprep.subr.bf16.mxu0 %v1170
    %1234 = vmatpush1.bf16.msra.mxu0 %v1169
    %1235 = vmatprep.mubr.bf16.mxu0 %v1002
    %1236 = vmatmul.mubr.bf16.gmra.mrb[0].mxu0 %v1001
    %v1237 = vpop.f32.mrb[0].mxu0
    %v1238 = vadd.f32 0.0, %v1237
    %v1239 = vpop.f32.mrb[0].mxu0
    %v1240 = vadd.f32 0.0, %v1239
    %v1241 = vpop.f32.mrb[0].mxu0
    %v1242 = vadd.f32 0.0, %v1241
    %v1243 = vpop.f32.mrb[0].mxu0
    %v1244 = vadd.f32 0.0, %v1243
    %1245 = vdwg.mxu0
    %v1246 = vmax.f32 %v1238, %v1240
    %v1247 = vmax.f32 %v1242, %v1244
    %v1249 = vlaneseq
    %v1250 = vshrl.u32 %v1249, 7
    %v1251 = vsub.s32 0, %v1250
    %v1252 = vrot.slane %v1042, %v1251
    %v1254 = vadd.f32 %v1246, %v1252
    %v1255 = vadd.f32 %v1247, %v1252
    %v1256 = vmax.f32 %v1254, 0.0
    %v1257 = vmax.f32 %v1255, 0.0
    %v1258 = vpack.c.bf16 %v1257, %v1256
    %1259 = vmatprep.subr.bf16.mxu0 %v1140
    %1260 = vmatpush1.bf16.msra.mxu0 %v1139
    %1261 = vmatprep.subr.bf16.mxu0 %v1142
    %1262 = vmatpush1.bf16.msra.mxu0 %v1141
    %1263 = vmatprep.subr.bf16.mxu0 %v1144
    %1264 = vmatpush1.bf16.msra.mxu0 %v1143
    %1265 = vmatprep.subr.bf16.mxu0 %v1146
    %1266 = vmatpush1.bf16.msra.mxu0 %v1145
    %1267 = vmatprep.subr.bf16.mxu0 %v1148
    %1268 = vmatpush1.bf16.msra.mxu0 %v1147
    %1269 = vmatprep.subr.bf16.mxu0 %v1150
    %1270 = vmatpush1.bf16.msra.mxu0 %v1149
    %1271 = vmatprep.subr.bf16.mxu0 %v1152
    %1272 = vmatpush1.bf16.msra.mxu0 %v1151
    %1273 = vmatprep.subr.bf16.mxu0 %v1154
    %1274 = vmatpush1.bf16.msra.mxu0 %v1153
    %1275 = vmatprep.subr.bf16.mxu0 %v1156
    %1276 = vmatpush1.bf16.msra.mxu0 %v1155
    %1277 = vmatprep.subr.bf16.mxu0 %v1158
    %1278 = vmatpush1.bf16.msra.mxu0 %v1157
    %1279 = vmatprep.subr.bf16.mxu0 %v1160
    %1280 = vmatpush1.bf16.msra.mxu0 %v1159
    %1281 = vmatprep.subr.bf16.mxu0 %v1162
    %1282 = vmatpush1.bf16.msra.mxu0 %v1161
    %1283 = vmatprep.subr.bf16.mxu0 %v1164
    %1284 = vmatpush1.bf16.msra.mxu0 %v1163
    %1285 = vmatprep.subr.bf16.mxu0 %v1166
    %1286 = vmatpush1.bf16.msra.mxu0 %v1165
    %1287 = vmatprep.subr.bf16.mxu0 %v1168
    %1288 = vmatpush1.bf16.msra.mxu0 %v1167
    %1289 = vmatprep.subr.bf16.mxu0 %v1170
    %1290 = vmatpush1.bf16.msra.mxu0 %v1169
    %1291 = vmatprep.mubr.bf16.mxu0 %v1003
    %1292 = vmatmul.mubr.bf16.gmra.mrb[0].mxu0 %v1002
    %v1293 = vpop.f32.mrb[0].mxu0
    %v1294 = vadd.f32 0.0, %v1293
    %v1295 = vpop.f32.mrb[0].mxu0
    %v1296 = vadd.f32 0.0, %v1295
    %v1297 = vpop.f32.mrb[0].mxu0
    %v1298 = vadd.f32 0.0, %v1297
    %v1299 = vpop.f32.mrb[0].mxu0
    %v1300 = vadd.f32 0.0, %v1299
    %1301 = vdwg.mxu0
    %v1302 = vmax.f32 %v1294, %v1296
    %v1303 = vmax.f32 %v1298, %v1300
    %v1304 = vadd.f32 %v1302, %v1252
    %v1305 = vadd.f32 %v1303, %v1252
    %v1306 = vmax.f32 %v1304, 0.0
    %v1307 = vmax.f32 %v1305, 0.0
    %v1308 = vpack.c.bf16 %v1307, %v1306
    %1309 = vmatprep.subr.bf16.mxu0 %v1140
    %1310 = vmatpush1.bf16.msra.mxu0 %v1139
    %1311 = vmatprep.subr.bf16.mxu0 %v1142
    %1312 = vmatpush1.bf16.msra.mxu0 %v1141
    %1313 = vmatprep.subr.bf16.mxu0 %v1144
    %1314 = vmatpush1.bf16.msra.mxu0 %v1143
    %1315 = vmatprep.subr.bf16.mxu0 %v1146
    %1316 = vmatpush1.bf16.msra.mxu0 %v1145
    %1317 = vmatprep.subr.bf16.mxu0 %v1148
    %1318 = vmatpush1.bf16.msra.mxu0 %v1147
    %1319 = vmatprep.subr.bf16.mxu0 %v1150
    %1320 = vmatpush1.bf16.msra.mxu0 %v1149
    %1321 = vmatprep.subr.bf16.mxu0 %v1152
    %1322 = vmatpush1.bf16.msra.mxu0 %v1151
    %1323 = vmatprep.subr.bf16.mxu0 %v1154
    %1324 = vmatpush1.bf16.msra.mxu0 %v1153
    %1325 = vmatprep.subr.bf16.mxu0 %v1156
    %1326 = vmatpush1.bf16.msra.mxu0 %v1155
    %1327 = vmatprep.subr.bf16.mxu0 %v1158
    %1328 = vmatpush1.bf16.msra.mxu0 %v1157
    %1329 = vmatprep.subr.bf16.mxu0 %v1160
    %1330 = vmatpush1.bf16.msra.mxu0 %v1159
    %1331 = vmatprep.subr.bf16.mxu0 %v1162
    %1332 = vmatpush1.bf16.msra.mxu0 %v1161
    %1333 = vmatprep.subr.bf16.mxu0 %v1164
    %1334 = vmatpush1.bf16.msra.mxu0 %v1163
    %1335 = vmatprep.subr.bf16.mxu0 %v1166
    %1336 = vmatpush1.bf16.msra.mxu0 %v1165
    %1337 = vmatprep.subr.bf16.mxu0 %v1168
    %1338 = vmatpush1.bf16.msra.mxu0 %v1167
    %1339 = vmatprep.subr.bf16.mxu0 %v1170
    %1340 = vmatpush1.bf16.msra.mxu0 %v1169
    %1341 = vmatprep.mubr.bf16.mxu0 %v1004
    %1342 = vmatmul.mubr.bf16.gmra.mrb[0].mxu0 %v1003
    %v1343 = vpop.f32.mrb[0].mxu0
    %v1344 = vadd.f32 0.0, %v1343
    %v1345 = vpop.f32.mrb[0].mxu0
    %v1346 = vadd.f32 0.0, %v1345
    %v1347 = vpop.f32.mrb[0].mxu0
    %v1348 = vadd.f32 0.0, %v1347
    %v1349 = vpop.f32.mrb[0].mxu0
    %v1350 = vadd.f32 0.0, %v1349
    %1351 = vdwg.mxu0
    %v1352 = vmax.f32 %v1344, %v1346
    %v1353 = vmax.f32 %v1348, %v1350
    %v1354 = vadd.f32 %v1352, %v1252
    %v1355 = vadd.f32 %v1353, %v1252
    %v1356 = vmax.f32 %v1354, 0.0
    %v1357 = vmax.f32 %v1355, 0.0
    %v1358 = vpack.c.bf16 %v1357, %v1356
    %1359 = vmatprep.subr.bf16.mxu0 %v1140
    %1360 = vmatpush1.bf16.msra.mxu0 %v1139
    %1361 = vmatprep.subr.bf16.mxu0 %v1142
    %1362 = vmatpush1.bf16.msra.mxu0 %v1141
    %1363 = vmatprep.subr.bf16.mxu0 %v1144
    %1364 = vmatpush1.bf16.msra.mxu0 %v1143
    %1365 = vmatprep.subr.bf16.mxu0 %v1146
    %1366 = vmatpush1.bf16.msra.mxu0 %v1145
    %1367 = vmatprep.subr.bf16.mxu0 %v1148
    %1368 = vmatpush1.bf16.msra.mxu0 %v1147
    %1369 = vmatprep.subr.bf16.mxu0 %v1150
    %1370 = vmatpush1.bf16.msra.mxu0 %v1149
    %1371 = vmatprep.subr.bf16.mxu0 %v1152
    %1372 = vmatpush1.bf16.msra.mxu0 %v1151
    %1373 = vmatprep.subr.bf16.mxu0 %v1154
    %1374 = vmatpush1.bf16.msra.mxu0 %v1153
    %1375 = vmatprep.subr.bf16.mxu0 %v1156
    %1376 = vmatpush1.bf16.msra.mxu0 %v1155
    %1377 = vmatprep.subr.bf16.mxu0 %v1158
    %1378 = vmatpush1.bf16.msra.mxu0 %v1157
    %1379 = vmatprep.subr.bf16.mxu0 %v1160
    %1380 = vmatpush1.bf16.msra.mxu0 %v1159
    %1381 = vmatprep.subr.bf16.mxu0 %v1162
    %1382 = vmatpush1.bf16.msra.mxu0 %v1161
    %1383 = vmatprep.subr.bf16.mxu0 %v1164
    %1384 = vmatpush1.bf16.msra.mxu0 %v1163
    %1385 = vmatprep.subr.bf16.mxu0 %v1166
    %1386 = vmatpush1.bf16.msra.mxu0 %v1165
    %1387 = vmatprep.subr.bf16.mxu0 %v1168
    %1388 = vmatpush1.bf16.msra.mxu0 %v1167
    %1389 = vmatprep.subr.bf16.mxu0 %v1170
    %1390 = vmatpush1.bf16.msra.mxu0 %v1169
    %1391 = vmatprep.mubr.bf16.mxu0 %v1005
    %1392 = vmatmul.mubr.bf16.gmra.mrb[0].mxu0 %v1004
    %v1393 = vpop.f32.mrb[0].mxu0
    %v1394 = vadd.f32 0.0, %v1393
    %v1395 = vpop.f32.mrb[0].mxu0
    %v1396 = vadd.f32 0.0, %v1395
    %v1397 = vpop.f32.mrb[0].mxu0
    %v1398 = vadd.f32 0.0, %v1397
    %v1399 = vpop.f32.mrb[0].mxu0
    %v1400 = vadd.f32 0.0, %v1399
    %1401 = vdwg.mxu0
    %v1402 = vmax.f32 %v1394, %v1396
    %v1403 = vmax.f32 %v1398, %v1400
    %v1404 = vadd.f32 %v1402, %v1252
    %v1405 = vadd.f32 %v1403, %v1252
    %v1406 = vmax.f32 %v1404, 0.0
    %v1407 = vmax.f32 %v1405, 0.0
    %v1408 = vpack.c.bf16 %v1407, %v1406
    %1409 = vmatprep.subr.bf16.mxu0 %v1140
    %1410 = vmatpush1.bf16.msra.mxu0 %v1139
    %1411 = vmatprep.subr.bf16.mxu0 %v1142
    %1412 = vmatpush1.bf16.msra.mxu0 %v1141
    %1413 = vmatprep.subr.bf16.mxu0 %v1144
    %1414 = vmatpush1.bf16.msra.mxu0 %v1143
    %1415 = vmatprep.subr.bf16.mxu0 %v1146
    %1416 = vmatpush1.bf16.msra.mxu0 %v1145
    %1417 = vmatprep.subr.bf16.mxu0 %v1148
    %1418 = vmatpush1.bf16.msra.mxu0 %v1147
    %1419 = vmatprep.subr.bf16.mxu0 %v1150
    %1420 = vmatpush1.bf16.msra.mxu0 %v1149
    %1421 = vmatprep.subr.bf16.mxu0 %v1152
    %1422 = vmatpush1.bf16.msra.mxu0 %v1151
    %1423 = vmatprep.subr.bf16.mxu0 %v1154
    %1424 = vmatpush1.bf16.msra.mxu0 %v1153
    %1425 = vmatprep.subr.bf16.mxu0 %v1156
    %1426 = vmatpush1.bf16.msra.mxu0 %v1155
    %1427 = vmatprep.subr.bf16.mxu0 %v1158
    %1428 = vmatpush1.bf16.msra.mxu0 %v1157
    %1429 = vmatprep.subr.bf16.mxu0 %v1160
    %1430 = vmatpush1.bf16.msra.mxu0 %v1159
    %1431 = vmatprep.subr.bf16.mxu0 %v1162
    %1432 = vmatpush1.bf16.msra.mxu0 %v1161
    %1433 = vmatprep.subr.bf16.mxu0 %v1164
    %1434 = vmatpush1.bf16.msra.mxu0 %v1163
    %1435 = vmatprep.subr.bf16.mxu0 %v1166
    %1436 = vmatpush1.bf16.msra.mxu0 %v1165
    %1437 = vmatprep.subr.bf16.mxu0 %v1168
    %1438 = vmatpush1.bf16.msra.mxu0 %v1167
    %1439 = vmatprep.subr.bf16.mxu0 %v1170
    %1440 = vmatpush1.bf16.msra.mxu0 %v1169
    %1441 = vmatprep.mubr.bf16.mxu0 %v1006
    %1442 = vmatmul.mubr.bf16.gmra.mrb[0].mxu0 %v1005
    %v1443 = vpop.f32.mrb[0].mxu0
    %v1444 = vadd.f32 0.0, %v1443
    %v1445 = vpop.f32.mrb[0].mxu0
    %v1446 = vadd.f32 0.0, %v1445
    %v1447 = vpop.f32.mrb[0].mxu0
    %v1448 = vadd.f32 0.0, %v1447
    %v1449 = vpop.f32.mrb[0].mxu0
    %v1450 = vadd.f32 0.0, %v1449
    %1451 = vdwg.mxu0
    %v1452 = vmax.f32 %v1444, %v1446
    %v1453 = vmax.f32 %v1448, %v1450
    %v1454 = vadd.f32 %v1452, %v1252
    %v1455 = vadd.f32 %v1453, %v1252
    %v1456 = vmax.f32 %v1454, 0.0
    %v1457 = vmax.f32 %v1455, 0.0
    %v1458 = vpack.c.bf16 %v1457, %v1456
    %1459 = vmatprep.subr.bf16.mxu0 %v1140
    %1460 = vmatpush1.bf16.msra.mxu0 %v1139
    %1461 = vmatprep.subr.bf16.mxu0 %v1142
    %1462 = vmatpush1.bf16.msra.mxu0 %v1141
    %1463 = vmatprep.subr.bf16.mxu0 %v1144
    %1464 = vmatpush1.bf16.msra.mxu0 %v1143
    %1465 = vmatprep.subr.bf16.mxu0 %v1146
    %1466 = vmatpush1.bf16.msra.mxu0 %v1145
    %1467 = vmatprep.subr.bf16.mxu0 %v1148
    %1468 = vmatpush1.bf16.msra.mxu0 %v1147
    %1469 = vmatprep.subr.bf16.mxu0 %v1150
    %1470 = vmatpush1.bf16.msra.mxu0 %v1149
    %1471 = vmatprep.subr.bf16.mxu0 %v1152
    %1472 = vmatpush1.bf16.msra.mxu0 %v1151
    %1473 = vmatprep.subr.bf16.mxu0 %v1154
    %1474 = vmatpush1.bf16.msra.mxu0 %v1153
    %1475 = vmatprep.subr.bf16.mxu0 %v1156
    %1476 = vmatpush1.bf16.msra.mxu0 %v1155
    %1477 = vmatprep.subr.bf16.mxu0 %v1158
    %1478 = vmatpush1.bf16.msra.mxu0 %v1157
    %1479 = vmatprep.subr.bf16.mxu0 %v1160
    %1480 = vmatpush1.bf16.msra.mxu0 %v1159
    %1481 = vmatprep.subr.bf16.mxu0 %v1162
    %1482 = vmatpush1.bf16.msra.mxu0 %v1161
    %1483 = vmatprep.subr.bf16.mxu0 %v1164
    %1484 = vmatpush1.bf16.msra.mxu0 %v1163
    %1485 = vmatprep.subr.bf16.mxu0 %v1166
    %1486 = vmatpush1.bf16.msra.mxu0 %v1165
    %1487 = vmatprep.subr.bf16.mxu0 %v1168
    %1488 = vmatpush1.bf16.msra.mxu0 %v1167
    %1489 = vmatprep.subr.bf16.mxu0 %v1170
    %1490 = vmatpush1.bf16.msra.mxu0 %v1169
    %1491 = vmatprep.mubr.bf16.mxu0 %v1007
    %1492 = vmatmul.mubr.bf16.gmra.mrb[0].mxu0 %v1006
    %v1493 = vpop.f32.mrb[0].mxu0
    %v1494 = vadd.f32 0.0, %v1493
    %v1495 = vpop.f32.mrb[0].mxu0
    %v1496 = vadd.f32 0.0, %v1495
    %v1497 = vpop.f32.mrb[0].mxu0
    %v1498 = vadd.f32 0.0, %v1497
    %v1499 = vpop.f32.mrb[0].mxu0
    %v1500 = vadd.f32 0.0, %v1499
    %1501 = vdwg.mxu0
    %v1502 = vmax.f32 %v1494, %v1496
    %v1503 = vmax.f32 %v1498, %v1500
    %v1504 = vadd.f32 %v1502, %v1252
    %v1505 = vadd.f32 %v1503, %v1252
    %v1506 = vmax.f32 %v1504, 0.0
    %v1507 = vmax.f32 %v1505, 0.0
    %v1508 = vpack.c.bf16 %v1507, %v1506
    %1509 = vmatprep.subr.bf16.mxu0 %v1140
    %1510 = vmatpush1.bf16.msra.mxu0 %v1139
    %1511 = vmatprep.subr.bf16.mxu0 %v1142
    %1512 = vmatpush1.bf16.msra.mxu0 %v1141
    %1513 = vmatprep.subr.bf16.mxu0 %v1144
    %1514 = vmatpush1.bf16.msra.mxu0 %v1143
    %1515 = vmatprep.subr.bf16.mxu0 %v1146
    %1516 = vmatpush1.bf16.msra.mxu0 %v1145
    %1517 = vmatprep.subr.bf16.mxu0 %v1148
    %1518 = vmatpush1.bf16.msra.mxu0 %v1147
    %1519 = vmatprep.subr.bf16.mxu0 %v1150
    %1520 = vmatpush1.bf16.msra.mxu0 %v1149
    %1521 = vmatprep.subr.bf16.mxu0 %v1152
    %1522 = vmatpush1.bf16.msra.mxu0 %v1151
    %1523 = vmatprep.subr.bf16.mxu0 %v1154
    %1524 = vmatpush1.bf16.msra.mxu0 %v1153
    %1525 = vmatprep.subr.bf16.mxu0 %v1156
    %1526 = vmatpush1.bf16.msra.mxu0 %v1155
    %1527 = vmatprep.subr.bf16.mxu0 %v1158
    %1528 = vmatpush1.bf16.msra.mxu0 %v1157
    %1529 = vmatprep.subr.bf16.mxu0 %v1160
    %1530 = vmatpush1.bf16.msra.mxu0 %v1159
    %1531 = vmatprep.subr.bf16.mxu0 %v1162
    %1532 = vmatpush1.bf16.msra.mxu0 %v1161
    %1533 = vmatprep.subr.bf16.mxu0 %v1164
    %1534 = vmatpush1.bf16.msra.mxu0 %v1163
    %1535 = vmatprep.subr.bf16.mxu0 %v1166
    %1536 = vmatpush1.bf16.msra.mxu0 %v1165
    %1537 = vmatprep.subr.bf16.mxu0 %v1168
    %1538 = vmatpush1.bf16.msra.mxu0 %v1167
    %1539 = vmatprep.subr.bf16.mxu0 %v1170
    %1540 = vmatpush1.bf16.msra.mxu0 %v1169
    %1541 = vmatprep.mubr.bf16.mxu0 %v1008
    %1542 = vmatmul.mubr.bf16.gmra.mrb[0].mxu0 %v1007
    %v1543 = vpop.f32.mrb[0].mxu0
    %v1544 = vadd.f32 0.0, %v1543
    %v1545 = vpop.f32.mrb[0].mxu0
    %v1546 = vadd.f32 0.0, %v1545
    %v1547 = vpop.f32.mrb[0].mxu0
    %v1548 = vadd.f32 0.0, %v1547
    %v1549 = vpop.f32.mrb[0].mxu0
    %v1550 = vadd.f32 0.0, %v1549
    %1551 = vdwg.mxu0
    %v1552 = vmax.f32 %v1544, %v1546
    %v1553 = vmax.f32 %v1548, %v1550
    %v1554 = vadd.f32 %v1552, %v1252
    %v1555 = vadd.f32 %v1553, %v1252
    %v1556 = vmax.f32 %v1554, 0.0
    %v1557 = vmax.f32 %v1555, 0.0
    %v1558 = vpack.c.bf16 %v1557, %v1556
    %1559 = vmatprep.subr.bf16.mxu0 %v1140
    %1560 = vmatpush1.bf16.msra.mxu0 %v1139
    %1561 = vmatprep.subr.bf16.mxu0 %v1142
    %1562 = vmatpush1.bf16.msra.mxu0 %v1141
    %1563 = vmatprep.subr.bf16.mxu0 %v1144
    %1564 = vmatpush1.bf16.msra.mxu0 %v1143
    %1565 = vmatprep.subr.bf16.mxu0 %v1146
    %1566 = vmatpush1.bf16.msra.mxu0 %v1145
    %1567 = vmatprep.subr.bf16.mxu0 %v1148
    %1568 = vmatpush1.bf16.msra.mxu0 %v1147
    %1569 = vmatprep.subr.bf16.mxu0 %v1150
    %1570 = vmatpush1.bf16.msra.mxu0 %v1149
    %1571 = vmatprep.subr.bf16.mxu0 %v1152
    %1572 = vmatpush1.bf16.msra.mxu0 %v1151
    %1573 = vmatprep.subr.bf16.mxu0 %v1154
    %1574 = vmatpush1.bf16.msra.mxu0 %v1153
    %1575 = vmatprep.subr.bf16.mxu0 %v1156
    %1576 = vmatpush1.bf16.msra.mxu0 %v1155
    %1577 = vmatprep.subr.bf16.mxu0 %v1158
    %1578 = vmatpush1.bf16.msra.mxu0 %v1157
    %1579 = vmatprep.subr.bf16.mxu0 %v1160
    %1580 = vmatpush1.bf16.msra.mxu0 %v1159
    %1581 = vmatprep.subr.bf16.mxu0 %v1162
    %1582 = vmatpush1.bf16.msra.mxu0 %v1161
    %1583 = vmatprep.subr.bf16.mxu0 %v1164
    %1584 = vmatpush1.bf16.msra.mxu0 %v1163
    %1585 = vmatprep.subr.bf16.mxu0 %v1166
    %1586 = vmatpush1.bf16.msra.mxu0 %v1165
    %1587 = vmatprep.subr.bf16.mxu0 %v1168
    %1588 = vmatpush1.bf16.msra.mxu0 %v1167
    %1589 = vmatprep.subr.bf16.mxu0 %v1170
    %1590 = vmatpush1.bf16.msra.mxu0 %v1169
    %1591 = vmatprep.mubr.bf16.mxu0 %v1009
    %1592 = vmatmul.mubr.bf16.gmra.mrb[0].mxu0 %v1008
    %v1593 = vpop.f32.mrb[0].mxu0
    %v1594 = vadd.f32 0.0, %v1593
    %v1595 = vpop.f32.mrb[0].mxu0
    %v1596 = vadd.f32 0.0, %v1595
    %v1597 = vpop.f32.mrb[0].mxu0
    %v1598 = vadd.f32 0.0, %v1597
    %v1599 = vpop.f32.mrb[0].mxu0
    %v1600 = vadd.f32 0.0, %v1599
    %1601 = vdwg.mxu0
    %v1602 = vmax.f32 %v1594, %v1596
    %v1603 = vmax.f32 %v1598, %v1600
    %v1604 = vadd.f32 %v1602, %v1252
    %v1605 = vadd.f32 %v1603, %v1252
    %v1606 = vmax.f32 %v1604, 0.0
    %v1607 = vmax.f32 %v1605, 0.0
    %v1608 = vpack.c.bf16 %v1607, %v1606
    %v1609 = vld [vmem:[#allocation6] sm:$0xf]
    %v1610 = vld [vmem:[#allocation6 + $0x4] sm:$0xf]
    %v1611 = vld [vmem:[#allocation6 + $0x8] sm:$0xf]
    %v1612 = vld [vmem:[#allocation6 + $0xc] sm:$0xf]
    %v1613 = vld [vmem:[#allocation6 + $0x10] sm:$0xf]
    %v1614 = vld [vmem:[#allocation6 + $0x14] sm:$0xf]
    %v1615 = vld [vmem:[#allocation6 + $0x18] sm:$0xf]
    %v1616 = vld [vmem:[#allocation6 + $0x1c] sm:$0xf]
    %v1617 = vld [vmem:[#allocation6 + $0x20] sm:$0xf]
    %v1618 = vld [vmem:[#allocation6 + $0x24] sm:$0xf]
    %v1619 = vld [vmem:[#allocation6 + $0x28] sm:$0xf]
    %v1620 = vld [vmem:[#allocation6 + $0x2c] sm:$0xf]
    %v1621 = vld [vmem:[#allocation6 + $0x30] sm:$0xf]
    %v1622 = vld [vmem:[#allocation6 + $0x34] sm:$0xf]
    %v1623 = vld [vmem:[#allocation6 + $0x38] sm:$0xf]
    %v1624 = vld [vmem:[#allocation6 + $0x3c] sm:$0xf]
    %v1625 = vld [vmem:[#allocation6 + $0x40] sm:$0xf]
    %v1626 = vld [vmem:[#allocation6 + $0x44] sm:$0xf]
    %v1627 = vld [vmem:[#allocation6 + $0x48] sm:$0xf]
    %v1628 = vld [vmem:[#allocation6 + $0x4c] sm:$0xf]
    %v1629 = vld [vmem:[#allocation6 + $0x50] sm:$0xf]
    %v1630 = vld [vmem:[#allocation6 + $0x54] sm:$0xf]
    %v1631 = vld [vmem:[#allocation6 + $0x58] sm:$0xf]
    %v1632 = vld [vmem:[#allocation6 + $0x5c] sm:$0xf]
    %v1633 = vld [vmem:[#allocation6 + $0x60] sm:$0xf]
    %v1634 = vld [vmem:[#allocation6 + $0x64] sm:$0xf]
    %v1635 = vld [vmem:[#allocation6 + $0x68] sm:$0xf]
    %v1636 = vld [vmem:[#allocation6 + $0x6c] sm:$0xf]
    %v1637 = vld [vmem:[#allocation6 + $0x70] sm:$0xf]
    %v1638 = vld [vmem:[#allocation6 + $0x74] sm:$0xf]
    %v1639 = vld [vmem:[#allocation6 + $0x78] sm:$0xf]
    %v1640 = vld [vmem:[#allocation6 + $0x7c] sm:$0xf]
    %v1641 = vld [vmem:[#allocation6 + $0x80] sm:$0xf]
    %v1642 = vld [vmem:[#allocation6 + $0x84] sm:$0xf]
    %v1643 = vld [vmem:[#allocation6 + $0x88] sm:$0xf]
    %v1644 = vld [vmem:[#allocation6 + $0x8c] sm:$0xf]
    %v1645 = vld [vmem:[#allocation6 + $0x90] sm:$0xf]
    %v1646 = vld [vmem:[#allocation6 + $0x94] sm:$0xf]
    %v1647 = vld [vmem:[#allocation6 + $0x98] sm:$0xf]
    %v1648 = vld [vmem:[#allocation6 + $0x9c] sm:$0xf]
    %v1649 = vld [vmem:[#allocation6 + $0xa0] sm:$0xf]
    %v1650 = vld [vmem:[#allocation6 + $0xa4] sm:$0xf]
    %v1651 = vld [vmem:[#allocation6 + $0xa8] sm:$0xf]
    %v1652 = vld [vmem:[#allocation6 + $0xac] sm:$0xf]
    %v1653 = vld [vmem:[#allocation6 + $0xb0] sm:$0xf]
    %v1654 = vld [vmem:[#allocation6 + $0xb4] sm:$0xf]
    %v1655 = vld [vmem:[#allocation6 + $0xb8] sm:$0xf]
    %v1656 = vld [vmem:[#allocation6 + $0xbc] sm:$0xf]
    %v1657 = vld [vmem:[#allocation6 + $0xc0] sm:$0xf]
    %v1658 = vld [vmem:[#allocation6 + $0xc4] sm:$0xf]
    %v1659 = vld [vmem:[#allocation6 + $0xc8] sm:$0xf]
    %v1660 = vld [vmem:[#allocation6 + $0xcc] sm:$0xf]
    %v1661 = vld [vmem:[#allocation6 + $0xd0] sm:$0xf]
    %v1662 = vld [vmem:[#allocation6 + $0xd4] sm:$0xf]
    %v1663 = vld [vmem:[#allocation6 + $0xd8] sm:$0xf]
    %v1664 = vld [vmem:[#allocation6 + $0xdc] sm:$0xf]
    %v1665 = vld [vmem:[#allocation6 + $0xe0] sm:$0xf]
    %v1666 = vld [vmem:[#allocation6 + $0xe4] sm:$0xf]
    %v1667 = vld [vmem:[#allocation6 + $0xe8] sm:$0xf]
    %v1668 = vld [vmem:[#allocation6 + $0xec] sm:$0xf]
    %v1669 = vld [vmem:[#allocation6 + $0xf0] sm:$0xf]
    %v1670 = vld [vmem:[#allocation6 + $0xf4] sm:$0xf]
    %v1671 = vld [vmem:[#allocation6 + $0xf8] sm:$0xf]
    %v1672 = vld [vmem:[#allocation6 + $0xfc] sm:$0xf]
    %v1673 = vld [vmem:[#allocation6 + $0x100] sm:$0xf]
    %v1674 = vld [vmem:[#allocation6 + $0x104] sm:$0xf]
    %v1675 = vld [vmem:[#allocation6 + $0x108] sm:$0xf]
    %v1676 = vld [vmem:[#allocation6 + $0x10c] sm:$0xf]
    %v1677 = vld [vmem:[#allocation6 + $0x110] sm:$0xf]
    %v1678 = vld [vmem:[#allocation6 + $0x114] sm:$0xf]
    %v1679 = vld [vmem:[#allocation6 + $0x118] sm:$0xf]
    %v1680 = vld [vmem:[#allocation6 + $0x11c] sm:$0xf]
    %v1681 = vld [vmem:[#allocation6 + $0x120] sm:$0xf]
    %v1682 = vld [vmem:[#allocation6 + $0x124] sm:$0xf]
    %v1683 = vld [vmem:[#allocation6 + $0x128] sm:$0xf]
    %v1684 = vld [vmem:[#allocation6 + $0x12c] sm:$0xf]
    %v1685 = vld [vmem:[#allocation6 + $0x130] sm:$0xf]
    %v1686 = vld [vmem:[#allocation6 + $0x134] sm:$0xf]
    %v1687 = vld [vmem:[#allocation6 + $0x138] sm:$0xf]
    %v1688 = vld [vmem:[#allocation6 + $0x13c] sm:$0xf]
    %v1689 = vld [vmem:[#allocation6 + $0x140] sm:$0xf]
    %v1690 = vld [vmem:[#allocation6 + $0x144] sm:$0xf]
    %v1691 = vld [vmem:[#allocation6 + $0x148] sm:$0xf]
    %v1692 = vld [vmem:[#allocation6 + $0x14c] sm:$0xf]
    %v1693 = vld [vmem:[#allocation6 + $0x150] sm:$0xf]
    %v1694 = vld [vmem:[#allocation6 + $0x154] sm:$0xf]
    %v1695 = vld [vmem:[#allocation6 + $0x158] sm:$0xf]
    %v1696 = vld [vmem:[#allocation6 + $0x15c] sm:$0xf]
    %v1697 = vld [vmem:[#allocation6 + $0x160] sm:$0xf]
    %v1698 = vld [vmem:[#allocation6 + $0x164] sm:$0xf]
    %v1699 = vld [vmem:[#allocation6 + $0x168] sm:$0xf]
    %v1700 = vld [vmem:[#allocation6 + $0x16c] sm:$0xf]
    %v1701 = vld [vmem:[#allocation6 + $0x170] sm:$0xf]
    %v1702 = vld [vmem:[#allocation6 + $0x174] sm:$0xf]
    %v1703 = vld [vmem:[#allocation6 + $0x178] sm:$0xf]
    %v1704 = vld [vmem:[#allocation6 + $0x17c] sm:$0xf]
    %v1705 = vld [vmem:[#allocation6 + $0x180] sm:$0xf]
    %v1706 = vld [vmem:[#allocation6 + $0x184] sm:$0xf]
    %v1707 = vld [vmem:[#allocation6 + $0x188] sm:$0xf]
    %v1708 = vld [vmem:[#allocation6 + $0x18c] sm:$0xf]
    %v1709 = vld [vmem:[#allocation6 + $0x190] sm:$0xf]
    %v1710 = vld [vmem:[#allocation6 + $0x194] sm:$0xf]
    %v1711 = vld [vmem:[#allocation6 + $0x198] sm:$0xf]
    %v1712 = vld [vmem:[#allocation6 + $0x19c] sm:$0xf]
    %v1713 = vld [vmem:[#allocation6 + $0x1a0] sm:$0xf]
    %v1714 = vld [vmem:[#allocation6 + $0x1a4] sm:$0xf]
    %v1715 = vld [vmem:[#allocation6 + $0x1a8] sm:$0xf]
    %v1716 = vld [vmem:[#allocation6 + $0x1ac] sm:$0xf]
    %v1717 = vld [vmem:[#allocation6 + $0x1b0] sm:$0xf]
    %v1718 = vld [vmem:[#allocation6 + $0x1b4] sm:$0xf]
    %v1719 = vld [vmem:[#allocation6 + $0x1b8] sm:$0xf]
    %v1720 = vld [vmem:[#allocation6 + $0x1bc] sm:$0xf]
    %v1721 = vld [vmem:[#allocation6 + $0x1c0] sm:$0xf]
    %v1722 = vld [vmem:[#allocation6 + $0x1c4] sm:$0xf]
    %v1723 = vld [vmem:[#allocation6 + $0x1c8] sm:$0xf]
    %v1724 = vld [vmem:[#allocation6 + $0x1cc] sm:$0xf]
    %v1725 = vld [vmem:[#allocation6 + $0x1d0] sm:$0xf]
    %v1726 = vld [vmem:[#allocation6 + $0x1d4] sm:$0xf]
    %v1727 = vld [vmem:[#allocation6 + $0x1d8] sm:$0xf]
    %v1728 = vld [vmem:[#allocation6 + $0x1dc] sm:$0xf]
    %v1729 = vld [vmem:[#allocation6 + $0x1e0] sm:$0xf]
    %v1730 = vld [vmem:[#allocation6 + $0x1e4] sm:$0xf]
    %v1731 = vld [vmem:[#allocation6 + $0x1e8] sm:$0xf]
    %v1732 = vld [vmem:[#allocation6 + $0x1ec] sm:$0xf]
    %v1733 = vld [vmem:[#allocation6 + $0x1f0] sm:$0xf]
    %v1734 = vld [vmem:[#allocation6 + $0x1f4] sm:$0xf]
    %v1735 = vld [vmem:[#allocation6 + $0x1f8] sm:$0xf]
    %v1736 = vld [vmem:[#allocation6 + $0x1fc] sm:$0xf]
    %v1737 = vld [vmem:[%s6] sm:$0x1]
    %v1739 = vlaneseq
    %v1740 = vshrl.u32 %v1739, 7
    %v1741 = vsub.s32 0, %v1740
    %v1742 = vrot.slane %v1737, %v1741
    %v1872 = vunpack.c.l.b16 %v1609
    %v1873 = vunpack.c.l.b16 %v1610
    %v1874 = vunpack.c.l.b16 %v1611
    %v1875 = vunpack.c.l.b16 %v1612
    %v1876 = vunpack.c.l.b16 %v1613
    %v1877 = vunpack.c.l.b16 %v1614
    %v1878 = vunpack.c.l.b16 %v1615
    %v1879 = vunpack.c.l.b16 %v1616
    %v1880 = vunpack.c.l.b16 %v1617
    %v1881 = vunpack.c.l.b16 %v1618
    %v1882 = vunpack.c.l.b16 %v1619
    %v1883 = vunpack.c.l.b16 %v1620
    %v1884 = vunpack.c.l.b16 %v1621
    %v1885 = vunpack.c.l.b16 %v1622
    %v1886 = vunpack.c.l.b16 %v1623
    %v1887 = vunpack.c.l.b16 %v1624
    %v1888 = vunpack.c.l.b16 %v1625
    %v1889 = vunpack.c.l.b16 %v1626
    %v1890 = vunpack.c.l.b16 %v1627
    %v1891 = vunpack.c.l.b16 %v1628
    %v1892 = vunpack.c.l.b16 %v1629
    %v1893 = vunpack.c.l.b16 %v1630
    %v1894 = vunpack.c.l.b16 %v1631
    %v1895 = vunpack.c.l.b16 %v1632
    %v1896 = vunpack.c.l.b16 %v1633
    %v1897 = vunpack.c.l.b16 %v1634
    %v1898 = vunpack.c.l.b16 %v1635
    %v1899 = vunpack.c.l.b16 %v1636
    %v1900 = vunpack.c.l.b16 %v1637
    %v1901 = vunpack.c.l.b16 %v1638
    %v1902 = vunpack.c.l.b16 %v1639
    %v1903 = vunpack.c.l.b16 %v1640
    %v1904 = vunpack.c.l.b16 %v1641
    %v1905 = vunpack.c.l.b16 %v1642
    %v1906 = vunpack.c.l.b16 %v1643
    %v1907 = vunpack.c.l.b16 %v1644
    %v1908 = vunpack.c.l.b16 %v1645
    %v1909 = vunpack.c.l.b16 %v1646
    %v1910 = vunpack.c.l.b16 %v1647
    %v1911 = vunpack.c.l.b16 %v1648
    %v1912 = vunpack.c.l.b16 %v1649
    %v1913 = vunpack.c.l.b16 %v1650
    %v1914 = vunpack.c.l.b16 %v1651
    %v1915 = vunpack.c.l.b16 %v1652
    %v1916 = vunpack.c.l.b16 %v1653
    %v1917 = vunpack.c.l.b16 %v1654
    %v1918 = vunpack.c.l.b16 %v1655
    %v1919 = vunpack.c.l.b16 %v1656
    %v1920 = vunpack.c.l.b16 %v1657
    %v1921 = vunpack.c.l.b16 %v1658
    %v1922 = vunpack.c.l.b16 %v1659
    %v1923 = vunpack.c.l.b16 %v1660
    %v1924 = vunpack.c.l.b16 %v1661
    %v1925 = vunpack.c.l.b16 %v1662
    %v1926 = vunpack.c.l.b16 %v1663
    %v1927 = vunpack.c.l.b16 %v1664
    %v1928 = vunpack.c.l.b16 %v1665
    %v1929 = vunpack.c.l.b16 %v1666
    %v1930 = vunpack.c.l.b16 %v1667
    %v1931 = vunpack.c.l.b16 %v1668
    %v1932 = vunpack.c.l.b16 %v1669
    %v1933 = vunpack.c.l.b16 %v1670
    %v1934 = vunpack.c.l.b16 %v1671
    %v1935 = vunpack.c.l.b16 %v1672
    %v1936 = vunpack.c.l.b16 %v1673
    %v1937 = vunpack.c.l.b16 %v1674
    %v1938 = vunpack.c.l.b16 %v1675
    %v1939 = vunpack.c.l.b16 %v1676
    %v1940 = vunpack.c.l.b16 %v1677
    %v1941 = vunpack.c.l.b16 %v1678
    %v1942 = vunpack.c.l.b16 %v1679
    %v1943 = vunpack.c.l.b16 %v1680
    %v1944 = vunpack.c.l.b16 %v1681
    %v1945 = vunpack.c.l.b16 %v1682
    %v1946 = vunpack.c.l.b16 %v1683
    %v1947 = vunpack.c.l.b16 %v1684
    %v1948 = vunpack.c.l.b16 %v1685
    %v1949 = vunpack.c.l.b16 %v1686
    %v1950 = vunpack.c.l.b16 %v1687
    %v1951 = vunpack.c.l.b16 %v1688
    %v1952 = vunpack.c.l.b16 %v1689
    %v1953 = vunpack.c.l.b16 %v1690
    %v1954 = vunpack.c.l.b16 %v1691
    %v1955 = vunpack.c.l.b16 %v1692
    %v1956 = vunpack.c.l.b16 %v1693
    %v1957 = vunpack.c.l.b16 %v1694
    %v1958 = vunpack.c.l.b16 %v1695
    %v1959 = vunpack.c.l.b16 %v1696
    %v1960 = vunpack.c.l.b16 %v1697
    %v1961 = vunpack.c.l.b16 %v1698
    %v1962 = vunpack.c.l.b16 %v1699
    %v1963 = vunpack.c.l.b16 %v1700
    %v1964 = vunpack.c.l.b16 %v1701
    %v1965 = vunpack.c.l.b16 %v1702
    %v1966 = vunpack.c.l.b16 %v1703
    %v1967 = vunpack.c.l.b16 %v1704
    %v1968 = vunpack.c.l.b16 %v1705
    %v1969 = vunpack.c.l.b16 %v1706
    %v1970 = vunpack.c.l.b16 %v1707
    %v1971 = vunpack.c.l.b16 %v1708
    %v1972 = vunpack.c.l.b16 %v1709
    %v1973 = vunpack.c.l.b16 %v1710
    %v1974 = vunpack.c.l.b16 %v1711
    %v1975 = vunpack.c.l.b16 %v1712
    %v1976 = vunpack.c.l.b16 %v1713
    %v1977 = vunpack.c.l.b16 %v1714
    %v1978 = vunpack.c.l.b16 %v1715
    %v1979 = vunpack.c.l.b16 %v1716
    %v1980 = vunpack.c.l.b16 %v1717
    %v1981 = vunpack.c.l.b16 %v1718
    %v1982 = vunpack.c.l.b16 %v1719
    %v1983 = vunpack.c.l.b16 %v1720
    %v1984 = vunpack.c.l.b16 %v1721
    %v1985 = vunpack.c.l.b16 %v1722
    %v1986 = vunpack.c.l.b16 %v1723
    %v1987 = vunpack.c.l.b16 %v1724
    %v1988 = vunpack.c.l.b16 %v1725
    %v1989 = vunpack.c.l.b16 %v1726
    %v1990 = vunpack.c.l.b16 %v1727
    %v1991 = vunpack.c.l.b16 %v1728
    %v1992 = vunpack.c.l.b16 %v1729
    %v1993 = vunpack.c.l.b16 %v1730
    %v1994 = vunpack.c.l.b16 %v1731
    %v1995 = vunpack.c.l.b16 %v1732
    %v1996 = vunpack.c.l.b16 %v1733
    %v1997 = vunpack.c.l.b16 %v1734
    %v1998 = vunpack.c.l.b16 %v1735
    %v1999 = vunpack.c.l.b16 %v1736
    %v2000 = vpack.c.b16 %v1873, %v1872
    %v2001 = vpack.c.b16 %v1875, %v1874
    %v2002 = vpack.c.b16 %v1877, %v1876
    %v2003 = vpack.c.b16 %v1879, %v1878
    %v2004 = vpack.c.b16 %v1881, %v1880
    %v2005 = vpack.c.b16 %v1883, %v1882
    %v2006 = vpack.c.b16 %v1885, %v1884
    %v2007 = vpack.c.b16 %v1887, %v1886
    %v2008 = vpack.c.b16 %v1889, %v1888
    %v2009 = vpack.c.b16 %v1891, %v1890
    %v2010 = vpack.c.b16 %v1893, %v1892
    %v2011 = vpack.c.b16 %v1895, %v1894
    %v2012 = vpack.c.b16 %v1897, %v1896
    %v2013 = vpack.c.b16 %v1899, %v1898
    %v2014 = vpack.c.b16 %v1901, %v1900
    %v2015 = vpack.c.b16 %v1903, %v1902
    %v2016 = vpack.c.b16 %v1905, %v1904
    %v2017 = vpack.c.b16 %v1907, %v1906
    %v2018 = vpack.c.b16 %v1909, %v1908
    %v2019 = vpack.c.b16 %v1911, %v1910
    %v2020 = vpack.c.b16 %v1913, %v1912
    %v2021 = vpack.c.b16 %v1915, %v1914
    %v2022 = vpack.c.b16 %v1917, %v1916
    %v2023 = vpack.c.b16 %v1919, %v1918
    %v2024 = vpack.c.b16 %v1921, %v1920
    %v2025 = vpack.c.b16 %v1923, %v1922
    %v2026 = vpack.c.b16 %v1925, %v1924
    %v2027 = vpack.c.b16 %v1927, %v1926
    %v2028 = vpack.c.b16 %v1929, %v1928
    %v2029 = vpack.c.b16 %v1931, %v1930
    %v2030 = vpack.c.b16 %v1933, %v1932
    %v2031 = vpack.c.b16 %v1935, %v1934
    %v2032 = vpack.c.b16 %v1937, %v1936
    %v2033 = vpack.c.b16 %v1939, %v1938
    %v2034 = vpack.c.b16 %v1941, %v1940
    %v2035 = vpack.c.b16 %v1943, %v1942
    %v2036 = vpack.c.b16 %v1945, %v1944
    %v2037 = vpack.c.b16 %v1947, %v1946
    %v2038 = vpack.c.b16 %v1949, %v1948
    %v2039 = vpack.c.b16 %v1951, %v1950
    %v2040 = vpack.c.b16 %v1953, %v1952
    %v2041 = vpack.c.b16 %v1955, %v1954
    %v2042 = vpack.c.b16 %v1957, %v1956
    %v2043 = vpack.c.b16 %v1959, %v1958
    %v2044 = vpack.c.b16 %v1961, %v1960
    %v2045 = vpack.c.b16 %v1963, %v1962
    %v2046 = vpack.c.b16 %v1965, %v1964
    %v2047 = vpack.c.b16 %v1967, %v1966
    %v2048 = vpack.c.b16 %v1969, %v1968
    %v2049 = vpack.c.b16 %v1971, %v1970
    %v2050 = vpack.c.b16 %v1973, %v1972
    %v2051 = vpack.c.b16 %v1975, %v1974
    %v2052 = vpack.c.b16 %v1977, %v1976
    %v2053 = vpack.c.b16 %v1979, %v1978
    %v2054 = vpack.c.b16 %v1981, %v1980
    %v2055 = vpack.c.b16 %v1983, %v1982
    %v2056 = vpack.c.b16 %v1985, %v1984
    %v2057 = vpack.c.b16 %v1987, %v1986
    %v2058 = vpack.c.b16 %v1989, %v1988
    %v2059 = vpack.c.b16 %v1991, %v1990
    %v2060 = vpack.c.b16 %v1993, %v1992
    %v2061 = vpack.c.b16 %v1995, %v1994
    %v2062 = vpack.c.b16 %v1997, %v1996
    %v2063 = vpack.c.b16 %v1999, %v1998
    %2128 = vmatprep.subr.bf16.mxu0 0
    %2129 = vmatpush1.bf16.msra.mxu0 %v2000
    %2130 = vmatprep.subr.bf16.mxu0 0
    %2131 = vmatpush1.bf16.msra.mxu0 %v2001
    %2132 = vmatprep.subr.bf16.mxu0 0
    %2133 = vmatpush1.bf16.msra.mxu0 %v2002
    %2134 = vmatprep.subr.bf16.mxu0 0
    %2135 = vmatpush1.bf16.msra.mxu0 %v2003
    %2136 = vmatprep.subr.bf16.mxu0 0
    %2137 = vmatpush1.bf16.msra.mxu0 %v2004
    %2138 = vmatprep.subr.bf16.mxu0 0
    %2139 = vmatpush1.bf16.msra.mxu0 %v2005
    %2140 = vmatprep.subr.bf16.mxu0 0
    %2141 = vmatpush1.bf16.msra.mxu0 %v2006
    %2142 = vmatprep.subr.bf16.mxu0 0
    %2143 = vmatpush1.bf16.msra.mxu0 %v2007
    %2144 = vmatprep.subr.bf16.mxu0 0
    %2145 = vmatpush1.bf16.msra.mxu0 %v2008
    %2146 = vmatprep.subr.bf16.mxu0 0
    %2147 = vmatpush1.bf16.msra.mxu0 %v2009
    %2148 = vmatprep.subr.bf16.mxu0 0
    %2149 = vmatpush1.bf16.msra.mxu0 %v2010
    %2150 = vmatprep.subr.bf16.mxu0 0
    %2151 = vmatpush1.bf16.msra.mxu0 %v2011
    %2152 = vmatprep.subr.bf16.mxu0 0
    %2153 = vmatpush1.bf16.msra.mxu0 %v2012
    %2154 = vmatprep.subr.bf16.mxu0 0
    %2155 = vmatpush1.bf16.msra.mxu0 %v2013
    %2156 = vmatprep.subr.bf16.mxu0 0
    %2157 = vmatpush1.bf16.msra.mxu0 %v2014
    %2158 = vmatprep.subr.bf16.mxu0 0
    %2159 = vmatpush1.bf16.msra.mxu0 %v2015
    %2160 = vmatprep.mubr.bf16.mxu0 %v1308
    %2161 = vmatmul.mubr.bf16.gmra.mrb[0].mxu0 %v1258
    %v2162 = vpop.f32.mrb[0].mxu0
    %v2163 = vadd.f32 %v1742, %v2162
    %v2164 = vpop.f32.mrb[0].mxu0
    %v2165 = vpop.f32.mrb[0].mxu0
    %v2166 = vadd.f32 %v1742, %v2165
    %v2167 = vpop.f32.mrb[0].mxu0
    %2168 = vdwg.mxu0
    %2169 = vmatprep.subr.bf16.mxu0 0
    %2170 = vmatpush1.bf16.msra.mxu0 %v2016
    %2171 = vmatprep.subr.bf16.mxu0 0
    %2172 = vmatpush1.bf16.msra.mxu0 %v2017
    %2173 = vmatprep.subr.bf16.mxu0 0
    %2174 = vmatpush1.bf16.msra.mxu0 %v2018
    %2175 = vmatprep.subr.bf16.mxu0 0
    %2176 = vmatpush1.bf16.msra.mxu0 %v2019
    %2177 = vmatprep.subr.bf16.mxu0 0
    %2178 = vmatpush1.bf16.msra.mxu0 %v2020
    %2179 = vmatprep.subr.bf16.mxu0 0
    %2180 = vmatpush1.bf16.msra.mxu0 %v2021
    %2181 = vmatprep.subr.bf16.mxu0 0
    %2182 = vmatpush1.bf16.msra.mxu0 %v2022
    %2183 = vmatprep.subr.bf16.mxu0 0
    %2184 = vmatpush1.bf16.msra.mxu0 %v2023
    %2185 = vmatprep.subr.bf16.mxu0 0
    %2186 = vmatpush1.bf16.msra.mxu0 %v2024
    %2187 = vmatprep.subr.bf16.mxu0 0
    %2188 = vmatpush1.bf16.msra.mxu0 %v2025
    %2189 = vmatprep.subr.bf16.mxu0 0
    %2190 = vmatpush1.bf16.msra.mxu0 %v2026
    %2191 = vmatprep.subr.bf16.mxu0 0
    %2192 = vmatpush1.bf16.msra.mxu0 %v2027
    %2193 = vmatprep.subr.bf16.mxu0 0
    %2194 = vmatpush1.bf16.msra.mxu0 %v2028
    %2195 = vmatprep.subr.bf16.mxu0 0
    %2196 = vmatpush1.bf16.msra.mxu0 %v2029
    %2197 = vmatprep.subr.bf16.mxu0 0
    %2198 = vmatpush1.bf16.msra.mxu0 %v2030
    %2199 = vmatprep.subr.bf16.mxu0 0
    %2200 = vmatpush1.bf16.msra.mxu0 %v2031
    %2201 = vmatprep.mubr.bf16.mxu0 %v1408
    %2202 = vmatmul.mubr.bf16.gmra.mrb[0].mxu0 %v1358
    %v2203 = vpop.f32.mrb[0].mxu0
    %v2204 = vadd.f32 %v2163, %v2203
    %v2205 = vpop.f32.mrb[0].mxu0
    %v2206 = vpop.f32.mrb[0].mxu0
    %v2207 = vadd.f32 %v2166, %v2206
    %v2208 = vpop.f32.mrb[0].mxu0
    %2209 = vdwg.mxu0
    %2210 = vmatprep.subr.bf16.mxu0 0
    %2211 = vmatpush1.bf16.msra.mxu0 %v2032
    %2212 = vmatprep.subr.bf16.mxu0 0
    %2213 = vmatpush1.bf16.msra.mxu0 %v2033
    %2214 = vmatprep.subr.bf16.mxu0 0
    %2215 = vmatpush1.bf16.msra.mxu0 %v2034
    %2216 = vmatprep.subr.bf16.mxu0 0
    %2217 = vmatpush1.bf16.msra.mxu0 %v2035
    %2218 = vmatprep.subr.bf16.mxu0 0
    %2219 = vmatpush1.bf16.msra.mxu0 %v2036
    %2220 = vmatprep.subr.bf16.mxu0 0
    %2221 = vmatpush1.bf16.msra.mxu0 %v2037
    %2222 = vmatprep.subr.bf16.mxu0 0
    %2223 = vmatpush1.bf16.msra.mxu0 %v2038
    %2224 = vmatprep.subr.bf16.mxu0 0
    %2225 = vmatpush1.bf16.msra.mxu0 %v2039
    %2226 = vmatprep.subr.bf16.mxu0 0
    %2227 = vmatpush1.bf16.msra.mxu0 %v2040
    %2228 = vmatprep.subr.bf16.mxu0 0
    %2229 = vmatpush1.bf16.msra.mxu0 %v2041
    %2230 = vmatprep.subr.bf16.mxu0 0
    %2231 = vmatpush1.bf16.msra.mxu0 %v2042
    %2232 = vmatprep.subr.bf16.mxu0 0
    %2233 = vmatpush1.bf16.msra.mxu0 %v2043
    %2234 = vmatprep.subr.bf16.mxu0 0
    %2235 = vmatpush1.bf16.msra.mxu0 %v2044
    %2236 = vmatprep.subr.bf16.mxu0 0
    %2237 = vmatpush1.bf16.msra.mxu0 %v2045
    %2238 = vmatprep.subr.bf16.mxu0 0
    %2239 = vmatpush1.bf16.msra.mxu0 %v2046
    %2240 = vmatprep.subr.bf16.mxu0 0
    %2241 = vmatpush1.bf16.msra.mxu0 %v2047
    %2242 = vmatprep.mubr.bf16.mxu0 %v1508
    %2243 = vmatmul.mubr.bf16.gmra.mrb[0].mxu0 %v1458
    %v2244 = vpop.f32.mrb[0].mxu0
    %v2245 = vadd.f32 %v2204, %v2244
    %v2246 = vpop.f32.mrb[0].mxu0
    %v2247 = vpop.f32.mrb[0].mxu0
    %v2248 = vadd.f32 %v2207, %v2247
    %v2249 = vpop.f32.mrb[0].mxu0
    %2250 = vdwg.mxu0
    %2251 = vmatprep.subr.bf16.mxu0 0
    %2252 = vmatpush1.bf16.msra.mxu0 %v2048
    %2253 = vmatprep.subr.bf16.mxu0 0
    %2254 = vmatpush1.bf16.msra.mxu0 %v2049
    %2255 = vmatprep.subr.bf16.mxu0 0
    %2256 = vmatpush1.bf16.msra.mxu0 %v2050
    %2257 = vmatprep.subr.bf16.mxu0 0
    %2258 = vmatpush1.bf16.msra.mxu0 %v2051
    %2259 = vmatprep.subr.bf16.mxu0 0
    %2260 = vmatpush1.bf16.msra.mxu0 %v2052
    %2261 = vmatprep.subr.bf16.mxu0 0
    %2262 = vmatpush1.bf16.msra.mxu0 %v2053
    %2263 = vmatprep.subr.bf16.mxu0 0
    %2264 = vmatpush1.bf16.msra.mxu0 %v2054
    %2265 = vmatprep.subr.bf16.mxu0 0
    %2266 = vmatpush1.bf16.msra.mxu0 %v2055
    %2267 = vmatprep.subr.bf16.mxu0 0
    %2268 = vmatpush1.bf16.msra.mxu0 %v2056
    %2269 = vmatprep.subr.bf16.mxu0 0
    %2270 = vmatpush1.bf16.msra.mxu0 %v2057
    %2271 = vmatprep.subr.bf16.mxu0 0
    %2272 = vmatpush1.bf16.msra.mxu0 %v2058
    %2273 = vmatprep.subr.bf16.mxu0 0
    %2274 = vmatpush1.bf16.msra.mxu0 %v2059
    %2275 = vmatprep.subr.bf16.mxu0 0
    %2276 = vmatpush1.bf16.msra.mxu0 %v2060
    %2277 = vmatprep.subr.bf16.mxu0 0
    %2278 = vmatpush1.bf16.msra.mxu0 %v2061
    %2279 = vmatprep.subr.bf16.mxu0 0
    %2280 = vmatpush1.bf16.msra.mxu0 %v2062
    %2281 = vmatprep.subr.bf16.mxu0 0
    %2282 = vmatpush1.bf16.msra.mxu0 %v2063
    %2283 = vmatprep.mubr.bf16.mxu0 %v1608
    %2284 = vmatmul.mubr.bf16.gmra.mrb[0].mxu0 %v1558
    %v2285 = vpop.f32.mrb[0].mxu0
    %v2286 = vadd.f32 %v2245, %v2285
    %v2287 = vpop.f32.mrb[0].mxu0
    %v2288 = vpop.f32.mrb[0].mxu0
    %v2289 = vadd.f32 %v2248, %v2288
    %v2290 = vpop.f32.mrb[0].mxu0
    %2291 = vdwg.mxu0
    %2292 = vst [vmem:[%s7] sm:$0xff] %v2286
    %2293 = vst [vmem:[%s7 + $0x8] sm:$0xff] %v2289
    // Predicated region
    $region42: #{mapping_forward.1} parent=1 // pred_check
      _
    $region43: #{mapping_forward.1} parent=1 // pred_check_branch
      %2295 = sbr.rel (0) target = $region45
    $region44: #{mapping_forward.1} parent=1 // pred_region
      _
    $region45: #{mapping_forward.1} parent=1 // pred_fallthru
      _
    // Predicated region
    $region46: #{mapping_forward.1} parent=1 // pred_check
      _
    $region47: #{mapping_forward.1} parent=1 // pred_check_branch
      %2297 = sbr.rel (0) target = $region49
    $region48: #{mapping_forward.1} parent=1 // pred_region
      _
    $region49: #{mapping_forward.1} parent=1 // pred_fallthru
      _
    %2298 = vsyncpa [#allocation3], 1
    %2299 = vsyncpa [#allocation5], 1

</llo_original>
